<compile_context>
chip_gen: v7x
topology: tpu7x:2x2x1
jax: 0.10.0
libtpu: 0.0.40
codegen_flags: <defaults>
</compile_context>

<pallas_src>
import functools

import jax
import jax.numpy as jnp
from jax import lax
from jax.experimental import pallas as pl
from jax.experimental.pallas import tpu as pltpu


def _round_up(v, m):
    return ((v + m - 1) // m) * m


# ------------------------- fused backbone + head kernel ------------------------- #
def _make_kernel(nC8):
    """Fused ProtoNet forward for a block of `Bblk` episodes (all ops 2-D per episode)."""

    def kernel(supp_y_ref, supp_x_ref, qry_x_ref, w_ref, b_ref,
               scale_ref, bias_ref, o_ref, w_pad_ref):
        Bblk, nSupp, _ = supp_x_ref.shape
        nQry = qry_x_ref.shape[1]

        w = w_ref[...]          # (K, d_pad) bf16, resident once for all episodes
        b = b_ref[...]          # (1, d_pad) f32
        scale = scale_ref[0]    # SMEM scalars
        bias = bias_ref[0]

        # Only the first nC8 sublane rows of the lane-dense prototype slab ever get
        # data; the remaining rows stay zero so the final store is a full, unmasked
        # (nQry, nC_lane) slab and padded class columns read scale*(0 + bias).
        w_pad_ref[...] = jnp.zeros_like(w_pad_ref)

        for bi in range(Bblk):  # static unroll over the episode block (1 or B)
            # ---- synthetic backbone: flatten -> linear -> ReLU (bf16 MXU, f32 acc) ----
            xs = supp_x_ref[bi].astype(jnp.bfloat16)               # (nSupp, K)
            xq = qry_x_ref[bi].astype(jnp.bfloat16)                # (nQry, K)
            supp_f = jnp.maximum(
                jnp.dot(xs, w, preferred_element_type=jnp.float32) + b, 0.0)
            feat = jnp.maximum(
                jnp.dot(xq, w, preferred_element_type=jnp.float32) + b, 0.0)

            # ---- prototypes: in-kernel one-hot (nC8 x nSupp), bf16 matmul ----
            labels = supp_y_ref[bi]                                # (1, nSupp) int32
            onehot = (lax.broadcasted_iota(jnp.int32, (nC8, nSupp), 0)
                      == labels).astype(jnp.bfloat16)              # (nC8, nSupp)
            protos = jnp.dot(onehot, supp_f.astype(jnp.bfloat16),
                             preferred_element_type=jnp.float32)   # (nC8, d_pad)
            # The reference divides by per-class counts here; that is a no-op under the
            # L2 normalisation below, so it is deliberately omitted.

            # ---- F.normalize(x, 2, -1, eps=1e-12) == x * rsqrt(max(sum x^2, eps^2)) ----
            w_n = protos * lax.rsqrt(
                jnp.maximum(jnp.sum(protos * protos, axis=-1, keepdims=True), 1e-24))
            f_n = feat * lax.rsqrt(
                jnp.maximum(jnp.sum(feat * feat, axis=-1, keepdims=True), 1e-24))

            # ---- cosine scores against the lane-dense prototype slab (trans_b form) ----
            w_pad_ref[:nC8, :] = w_n.astype(jnp.bfloat16)
            scores = lax.dot_general(                              # (nQry, nC_lane) f32
                f_n.astype(jnp.bfloat16), w_pad_ref[...],
                dimension_numbers=(((1,), (1,)), ((), ())),
                preferred_element_type=jnp.float32)
            o_ref[bi] = scale * (scores + bias)

    return kernel


# ------------------------------ ProtoNet.forward -------------------------------- #
def _wants_batch_grid():
    # v7x has 2 TensorCores per chip: grid over the batch so both are used.  On the
    # single-TC v5e/v6e the per-step grid overhead is pure loss for this tiny kernel.
    try:
        return "v7" in jax.devices()[0].device_kind.lower()
    except Exception:
        return False


@functools.partial(jax.jit, static_argnames=("num_classes", "batch_grid"))
def protonet_forward(params, supp_x, supp_y, x, *, num_classes, batch_grid=False):
    """supp_x: (B, nSupp, C, H, W), supp_y: (B, nSupp) int, x: (B, nQry, C, H, W)."""
    B, nSupp, C, H, W = supp_x.shape
    nQry = x.shape[1]
    K = C * H * W
    d = params["w"].shape[1]

    d_pad = _round_up(d, 128)                  # lane-dense feature dim
    nC8 = _round_up(num_classes, 8)            # sublane-rounded class dim (proto path)
    nC_lane = _round_up(num_classes, 128)      # lane-dense class dim (scores / output)

    # Free reshapes only — no pad / concat / one_hot / dtype copy of the image data
    # in the wrapper; the kernel casts to bf16 and builds the one-hot itself.
    supp_r = supp_x.reshape(B, nSupp, K)
    qry_r = x.reshape(B, nQry, K)
    supp_y3 = supp_y.reshape(B, 1, nSupp).astype(jnp.int32)

    # Parameters are tiny: pad the feature dim to 128 lanes (zero columns contribute
    # nothing to norms or scores) and pre-cast the weight to bf16 for the MXU.
    w = jnp.pad(params["w"], ((0, 0), (0, d_pad - d))).astype(jnp.bfloat16)
    b = jnp.pad(params["b"].reshape(1, d), ((0, 0), (0, d_pad - d))).astype(jnp.float32)

    kernel = _make_kernel(nC8)
    out_shape = jax.ShapeDtypeStruct((B, nQry, nC_lane), jnp.float32)
    scratch = [pltpu.VMEM((nC_lane, d_pad), jnp.bfloat16)]
    smem = pl.BlockSpec(memory_space=pltpu.MemorySpace.SMEM)
    vmem = pl.BlockSpec(memory_space=pltpu.MemorySpace.VMEM)
    args = (supp_y3, supp_r, qry_r, w, b, params["scale_cls"], params["bias"])

    if batch_grid and B > 1:
        # One episode per grid step; "parallel" lets the two v7x TensorCores split it.
        logits_pad = pl.pallas_call(
            kernel,
            out_shape=out_shape,
            grid=(B,),
            in_specs=[
                pl.BlockSpec((1, 1, nSupp), lambda i: (i, 0, 0)),   # supp_y
                pl.BlockSpec((1, nSupp, K), lambda i: (i, 0, 0)),   # support images
                pl.BlockSpec((1, nQry, K), lambda i: (i, 0, 0)),    # query images
                pl.BlockSpec((K, d_pad), lambda i: (0, 0)),         # weight (resident)
                pl.BlockSpec((1, d_pad), lambda i: (0, 0)),         # bias
                smem, smem,                                         # scale_cls, bias
            ],
            out_specs=pl.BlockSpec((1, nQry, nC_lane), lambda i: (i, 0, 0)),
            scratch_shapes=scratch,
            compiler_params=pltpu.CompilerParams(
                dimension_semantics=("parallel",)),
        )(*args)
    else:
        logits_pad = pl.pallas_call(
            kernel,
            out_shape=out_shape,
            in_specs=[vmem, vmem, vmem, vmem, vmem, smem, smem],
            out_specs=vmem,
            scratch_shapes=scratch,
        )(*args)

    # Slice the lane-dense output slab back to the logical (B, nQry, nC) logits.
    return logits_pad[:, :, :num_classes]


# ------------------------------- pure-JAX reference ------------------------------ #
def protonet_reference(params, supp_x, supp_y, x, *, num_classes):
    """Pure-f32 mirror of the PyTorch module (true baseline, no bf16)."""
    B, nSupp, C, H, W = supp_x.shape
    nQry = x.shape[1]

    def bb(z):
        return jnp.maximum(z @ params["w"] + params["b"], 0.0)

    supp_f = bb(supp_x.reshape(B, nSupp, -1))
    feat = bb(x.reshape(B, nQry, -1))
    onehot = jnp.transpose(
        jax.nn.one_hot(supp_y, num_classes, dtype=jnp.float32), (0, 2, 1))
    protos = jnp.einsum("bcs,bsd->bcd", onehot, supp_f)
    protos = protos / jnp.sum(onehot, axis=2, keepdims=True)

    def norm(v):
        return v / jnp.maximum(jnp.linalg.norm(v, axis=-1, keepdims=True), 1e-12)

    scores = jnp.einsum("bqd,bcd->bqc", norm(feat), norm(protos))
    return params["scale_cls"][0] * (scores + params["bias"][0])


# ------------------------------------- main -------------------------------------- #
if __name__ == "__main__":
    key = jax.random.PRNGKey(0)
    k_w, k_supp, k_qry = jax.random.split(key, 3)

    # Small shapes consistent with the module's forward.
    B, nC, shots, nQry = 2, 5, 2, 6
    C, H, W, d = 4, 16, 16, 32
    nSupp = nC * shots
    K = C * H * W

    # Deterministic parameters (PyTorch init: bias=0, scale_cls=10; backbone synthetic).
    params = {
        "w": jax.random.normal(k_w, (K, d), dtype=jnp.float32) * 0.02,
        "b": jnp.zeros((1, d), dtype=jnp.float32),
        "scale_cls": jnp.full((1,), 10.0, dtype=jnp.float32),
        "bias": jnp.zeros((1,), dtype=jnp.float32),
    }

    supp_x = jax.random.normal(k_supp, (B, nSupp, C, H, W), dtype=jnp.float32)
    x = jax.random.normal(k_qry, (B, nQry, C, H, W), dtype=jnp.float32)
    # every class appears `shots` times, so class counts are nonzero
    supp_y = jnp.tile(jnp.arange(nC, dtype=jnp.int32), (B, shots))  # (B, nSupp)

    logits = protonet_forward(params, supp_x, supp_y, x,
                              num_classes=nC, batch_grid=_wants_batch_grid())
    logits = jax.block_until_ready(logits)

    ref = protonet_reference(params, supp_x, supp_y, x, num_classes=nC)
    assert logits.shape == (B, nQry, nC), logits.shape
    max_err = float(jnp.max(jnp.abs(logits - ref)))
    # bf16 MXU operands vs. the pure-f32 reference; error is amplified by scale_cls=10.
    assert max_err < 0.25, f"max abs err {max_err}"

    print("KERNEL_OK")
</pallas_src>

<mosaic_0001>
module attributes {stable_mosaic.version = 11 : i64} {
  func.func @kernel(%arg0: memref<2x1x10xi32, #tpu.memory_space<vmem>>, %arg1: memref<2x10x1024xf32, #tpu.memory_space<vmem>>, %arg2: memref<2x6x1024xf32, #tpu.memory_space<vmem>>, %arg3: memref<1024x128xbf16, #tpu.memory_space<vmem>>, %arg4: memref<1x128xf32, #tpu.memory_space<vmem>>, %arg5: memref<1xf32, #tpu.memory_space<smem>>, %arg6: memref<1xf32, #tpu.memory_space<smem>>, %arg7: memref<2x6x128xf32, #tpu.memory_space<vmem>>, %arg8: memref<128x128xbf16, #tpu.memory_space<vmem>>) attributes {dimension_semantics = [], scalar_prefetch = 0 : i64, scratch_operands = 1 : i64, tpu.core_type = #tpu.core_type<tc>} {
    %c0 = arith.constant 0 : index
    %c0_0 = arith.constant 0 : index
    %0 = vector.load %arg3[%c0, %c0_0] : memref<1024x128xbf16, #tpu.memory_space<vmem>>, vector<1024x128xbf16>
    %c0_1 = arith.constant 0 : index
    %c0_2 = arith.constant 0 : index
    %1 = vector.load %arg4[%c0_1, %c0_2] : memref<1x128xf32, #tpu.memory_space<vmem>>, vector<1x128xf32>
    %c0_3 = arith.constant 0 : index
    %2 = memref.load %arg5[%c0_3] : memref<1xf32, #tpu.memory_space<smem>>
    %c0_4 = arith.constant 0 : index
    %3 = memref.load %arg6[%c0_4] : memref<1xf32, #tpu.memory_space<smem>>
    %cst = arith.constant 0.000000e+00 : bf16
    %4 = vector.broadcast %cst : bf16 to vector<128x128xbf16>
    %c0_5 = arith.constant 0 : index
    %c0_6 = arith.constant 0 : index
    %5 = vector.load %arg8[%c0_5, %c0_6] : memref<128x128xbf16, #tpu.memory_space<vmem>>, vector<128x128xbf16>
    tpu.vector_store %arg8[%c0_5, %c0_6], %4 {strides = array<i32>} : memref<128x128xbf16, #tpu.memory_space<vmem>>, vector<128x128xbf16>,
    %c0_7 = arith.constant 0 : index
    %c0_8 = arith.constant 0 : index
    %c0_9 = arith.constant 0 : index
    %6 = vector.load %arg1[%c0_7, %c0_8, %c0_9] : memref<2x10x1024xf32, #tpu.memory_space<vmem>>, vector<1x10x1024xf32>
    %7 = vector.shape_cast %6 : vector<1x10x1024xf32> to vector<10x1024xf32>
    %8 = arith.truncf %7 : vector<10x1024xf32> to vector<10x1024xbf16>
    %c0_10 = arith.constant 0 : index
    %c0_11 = arith.constant 0 : index
    %c0_12 = arith.constant 0 : index
    %9 = vector.load %arg2[%c0_10, %c0_11, %c0_12] : memref<2x6x1024xf32, #tpu.memory_space<vmem>>, vector<1x6x1024xf32>
    %10 = vector.shape_cast %9 : vector<1x6x1024xf32> to vector<6x1024xf32>
    %11 = arith.truncf %10 : vector<6x1024xf32> to vector<6x1024xbf16>
    %cst_13 = arith.constant dense<0.000000e+00> : vector<10x128xf32>
    %12 = tpu.matmul %8, %0, %cst_13 {dimension_numbers = #tpu.dot_dimension_numbers<[1], [0], [0], [1], [0, 0, 1, 1], [], []>} : vector<10x1024xbf16>, vector<1024x128xbf16>, vector<10x128xf32> -> vector<10x128xf32>
    %13 = vector.broadcast %1 : vector<1x128xf32> to vector<10x128xf32>
    %14 = arith.addf %12, %13 : vector<10x128xf32>
    %cst_14 = arith.constant 0.000000e+00 : f32
    %15 = vector.broadcast %cst_14 : f32 to vector<10x128xf32>
    %16 = arith.maximumf %14, %15 : vector<10x128xf32>
    %cst_15 = arith.constant dense<0.000000e+00> : vector<6x128xf32>
    %17 = tpu.matmul %11, %0, %cst_15 {dimension_numbers = #tpu.dot_dimension_numbers<[1], [0], [0], [1], [0, 0, 1, 1], [], []>} : vector<6x1024xbf16>, vector<1024x128xbf16>, vector<6x128xf32> -> vector<6x128xf32>
    %18 = vector.broadcast %1 : vector<1x128xf32> to vector<6x128xf32>
    %19 = arith.addf %17, %18 : vector<6x128xf32>
    %cst_16 = arith.constant 0.000000e+00 : f32
    %20 = vector.broadcast %cst_16 : f32 to vector<6x128xf32>
    %21 = arith.maximumf %19, %20 : vector<6x128xf32>
    %c0_17 = arith.constant 0 : index
    %c0_18 = arith.constant 0 : index
    %c0_19 = arith.constant 0 : index
    %22 = vector.load %arg0[%c0_17, %c0_18, %c0_19] : memref<2x1x10xi32, #tpu.memory_space<vmem>>, vector<1x1x10xi32>
    %23 = vector.shape_cast %22 : vector<1x1x10xi32> to vector<1x10xi32>
    %24 = tpu.iota {dimensions = array<i32: 0>} : vector<8x10xi32>
    %25 = vector.broadcast %23 : vector<1x10xi32> to vector<8x10xi32>
    %26 = arith.cmpi eq, %24, %25 : vector<8x10xi32>
    %27 = arith.extui %26 : vector<8x10xi1> to vector<8x10xi32>
    %28 = arith.sitofp %27 : vector<8x10xi32> to vector<8x10xf32>
    %29 = arith.truncf %28 : vector<8x10xf32> to vector<8x10xbf16>
    %30 = arith.truncf %16 : vector<10x128xf32> to vector<10x128xbf16>
    %cst_20 = arith.constant dense<0.000000e+00> : vector<8x128xf32>
    %31 = tpu.matmul %29, %30, %cst_20 {dimension_numbers = #tpu.dot_dimension_numbers<[1], [0], [0], [1], [0, 0, 1, 1], [], []>} : vector<8x10xbf16>, vector<10x128xbf16>, vector<8x128xf32> -> vector<8x128xf32>
    %32 = arith.mulf %31, %31 : vector<8x128xf32>
    %cst_21 = arith.constant dense<0.000000e+00> : vector<8xf32>
    %33 = vector.multi_reduction <add>, %32, %cst_21 [1] : vector<8x128xf32> to vector<8xf32>
    %34 = vector.shape_cast %33 : vector<8xf32> to vector<8x1xf32>
    %cst_22 = arith.constant 1.000000e-24 : f32
    %35 = vector.broadcast %cst_22 : f32 to vector<8x1xf32>
    %36 = arith.maximumf %34, %35 : vector<8x1xf32>
    %37 = math.rsqrt %36 : vector<8x1xf32>
    %38 = vector.broadcast %37 : vector<8x1xf32> to vector<8x128xf32>
    %39 = arith.mulf %31, %38 : vector<8x128xf32>
    %40 = arith.mulf %21, %21 : vector<6x128xf32>
    %cst_23 = arith.constant dense<0.000000e+00> : vector<6xf32>
    %41 = vector.multi_reduction <add>, %40, %cst_23 [1] : vector<6x128xf32> to vector<6xf32>
    %42 = vector.shape_cast %41 : vector<6xf32> to vector<6x1xf32>
    %cst_24 = arith.constant 1.000000e-24 : f32
    %43 = vector.broadcast %cst_24 : f32 to vector<6x1xf32>
    %44 = arith.maximumf %42, %43 : vector<6x1xf32>
    %45 = math.rsqrt %44 : vector<6x1xf32>
    %46 = vector.broadcast %45 : vector<6x1xf32> to vector<6x128xf32>
    %47 = arith.mulf %21, %46 : vector<6x128xf32>
    %48 = arith.truncf %39 : vector<8x128xf32> to vector<8x128xbf16>
    %c0_25 = arith.constant 0 : index
    %c0_26 = arith.constant 0 : index
    %49 = vector.load %arg8[%c0_25, %c0_26] : memref<128x128xbf16, #tpu.memory_space<vmem>>, vector<8x128xbf16>
    tpu.vector_store %arg8[%c0_25, %c0_26], %48 {strides = array<i32>} : memref<128x128xbf16, #tpu.memory_space<vmem>>, vector<8x128xbf16>,
    %50 = arith.truncf %47 : vector<6x128xf32> to vector<6x128xbf16>
    %c0_27 = arith.constant 0 : index
    %c0_28 = arith.constant 0 : index
    %51 = vector.load %arg8[%c0_27, %c0_28] : memref<128x128xbf16, #tpu.memory_space<vmem>>, vector<128x128xbf16>
    %cst_29 = arith.constant dense<0.000000e+00> : vector<6x128xf32>
    %52 = tpu.matmul %50, %51, %cst_29 {dimension_numbers = #tpu.dot_dimension_numbers<[1], [1], [0], [0], [0, 0, 1, 0], [], []>} : vector<6x128xbf16>, vector<128x128xbf16>, vector<6x128xf32> -> vector<6x128xf32>
    %53 = vector.broadcast %3 : f32 to vector<6x128xf32>
    %54 = arith.addf %52, %53 : vector<6x128xf32>
    %55 = vector.broadcast %2 : f32 to vector<6x128xf32>
    %56 = arith.mulf %55, %54 : vector<6x128xf32>
    %c0_30 = arith.constant 0 : index
    %c0_31 = arith.constant 0 : index
    %c0_32 = arith.constant 0 : index
    %57 = vector.load %arg7[%c0_30, %c0_31, %c0_32] : memref<2x6x128xf32, #tpu.memory_space<vmem>>, vector<1x6x128xf32>
    %58 = vector.shape_cast %57 : vector<1x6x128xf32> to vector<6x128xf32>
    %59 = vector.shape_cast %56 : vector<6x128xf32> to vector<1x6x128xf32>
    tpu.vector_store %arg7[%c0_30, %c0_31, %c0_32], %59 {strides = array<i32>} : memref<2x6x128xf32, #tpu.memory_space<vmem>>, vector<1x6x128xf32>,
    %c1 = arith.constant 1 : index
    %c0_33 = arith.constant 0 : index
    %c0_34 = arith.constant 0 : index
    %60 = vector.load %arg1[%c1, %c0_33, %c0_34] : memref<2x10x1024xf32, #tpu.memory_space<vmem>>, vector<1x10x1024xf32>
    %61 = vector.shape_cast %60 : vector<1x10x1024xf32> to vector<10x1024xf32>
    %62 = arith.truncf %61 : vector<10x1024xf32> to vector<10x1024xbf16>
    %c1_35 = arith.constant 1 : index
    %c0_36 = arith.constant 0 : index
    %c0_37 = arith.constant 0 : index
    %63 = vector.load %arg2[%c1_35, %c0_36, %c0_37] : memref<2x6x1024xf32, #tpu.memory_space<vmem>>, vector<1x6x1024xf32>
    %64 = vector.shape_cast %63 : vector<1x6x1024xf32> to vector<6x1024xf32>
    %65 = arith.truncf %64 : vector<6x1024xf32> to vector<6x1024xbf16>
    %cst_38 = arith.constant dense<0.000000e+00> : vector<10x128xf32>
    %66 = tpu.matmul %62, %0, %cst_38 {dimension_numbers = #tpu.dot_dimension_numbers<[1], [0], [0], [1], [0, 0, 1, 1], [], []>} : vector<10x1024xbf16>, vector<1024x128xbf16>, vector<10x128xf32> -> vector<10x128xf32>
    %67 = vector.broadcast %1 : vector<1x128xf32> to vector<10x128xf32>
    %68 = arith.addf %66, %67 : vector<10x128xf32>
    %cst_39 = arith.constant 0.000000e+00 : f32
    %69 = vector.broadcast %cst_39 : f32 to vector<10x128xf32>
    %70 = arith.maximumf %68, %69 : vector<10x128xf32>
    %cst_40 = arith.constant dense<0.000000e+00> : vector<6x128xf32>
    %71 = tpu.matmul %65, %0, %cst_40 {dimension_numbers = #tpu.dot_dimension_numbers<[1], [0], [0], [1], [0, 0, 1, 1], [], []>} : vector<6x1024xbf16>, vector<1024x128xbf16>, vector<6x128xf32> -> vector<6x128xf32>
    %72 = vector.broadcast %1 : vector<1x128xf32> to vector<6x128xf32>
    %73 = arith.addf %71, %72 : vector<6x128xf32>
    %cst_41 = arith.constant 0.000000e+00 : f32
    %74 = vector.broadcast %cst_41 : f32 to vector<6x128xf32>
    %75 = arith.maximumf %73, %74 : vector<6x128xf32>
    %c1_42 = arith.constant 1 : index
    %c0_43 = arith.constant 0 : index
    %c0_44 = arith.constant 0 : index
    %76 = vector.load %arg0[%c1_42, %c0_43, %c0_44] : memref<2x1x10xi32, #tpu.memory_space<vmem>>, vector<1x1x10xi32>
    %77 = vector.shape_cast %76 : vector<1x1x10xi32> to vector<1x10xi32>
    %78 = tpu.iota {dimensions = array<i32: 0>} : vector<8x10xi32>
    %79 = vector.broadcast %77 : vector<1x10xi32> to vector<8x10xi32>
    %80 = arith.cmpi eq, %78, %79 : vector<8x10xi32>
    %81 = arith.extui %80 : vector<8x10xi1> to vector<8x10xi32>
    %82 = arith.sitofp %81 : vector<8x10xi32> to vector<8x10xf32>
    %83 = arith.truncf %82 : vector<8x10xf32> to vector<8x10xbf16>
    %84 = arith.truncf %70 : vector<10x128xf32> to vector<10x128xbf16>
    %cst_45 = arith.constant dense<0.000000e+00> : vector<8x128xf32>
    %85 = tpu.matmul %83, %84, %cst_45 {dimension_numbers = #tpu.dot_dimension_numbers<[1], [0], [0], [1], [0, 0, 1, 1], [], []>} : vector<8x10xbf16>, vector<10x128xbf16>, vector<8x128xf32> -> vector<8x128xf32>
    %86 = arith.mulf %85, %85 : vector<8x128xf32>
    %cst_46 = arith.constant dense<0.000000e+00> : vector<8xf32>
    %87 = vector.multi_reduction <add>, %86, %cst_46 [1] : vector<8x128xf32> to vector<8xf32>
    %88 = vector.shape_cast %87 : vector<8xf32> to vector<8x1xf32>
    %cst_47 = arith.constant 1.000000e-24 : f32
    %89 = vector.broadcast %cst_47 : f32 to vector<8x1xf32>
    %90 = arith.maximumf %88, %89 : vector<8x1xf32>
    %91 = math.rsqrt %90 : vector<8x1xf32>
    %92 = vector.broadcast %91 : vector<8x1xf32> to vector<8x128xf32>
    %93 = arith.mulf %85, %92 : vector<8x128xf32>
    %94 = arith.mulf %75, %75 : vector<6x128xf32>
    %cst_48 = arith.constant dense<0.000000e+00> : vector<6xf32>
    %95 = vector.multi_reduction <add>, %94, %cst_48 [1] : vector<6x128xf32> to vector<6xf32>
    %96 = vector.shape_cast %95 : vector<6xf32> to vector<6x1xf32>
    %cst_49 = arith.constant 1.000000e-24 : f32
    %97 = vector.broadcast %cst_49 : f32 to vector<6x1xf32>
    %98 = arith.maximumf %96, %97 : vector<6x1xf32>
    %99 = math.rsqrt %98 : vector<6x1xf32>
    %100 = vector.broadcast %99 : vector<6x1xf32> to vector<6x128xf32>
    %101 = arith.mulf %75, %100 : vector<6x128xf32>
    %102 = arith.truncf %93 : vector<8x128xf32> to vector<8x128xbf16>
    %c0_50 = arith.constant 0 : index
    %c0_51 = arith.constant 0 : index
    %103 = vector.load %arg8[%c0_50, %c0_51] : memref<128x128xbf16, #tpu.memory_space<vmem>>, vector<8x128xbf16>
    tpu.vector_store %arg8[%c0_50, %c0_51], %102 {strides = array<i32>} : memref<128x128xbf16, #tpu.memory_space<vmem>>, vector<8x128xbf16>,
    %104 = arith.truncf %101 : vector<6x128xf32> to vector<6x128xbf16>
    %c0_52 = arith.constant 0 : index
    %c0_53 = arith.constant 0 : index
    %105 = vector.load %arg8[%c0_52, %c0_53] : memref<128x128xbf16, #tpu.memory_space<vmem>>, vector<128x128xbf16>
    %cst_54 = arith.constant dense<0.000000e+00> : vector<6x128xf32>
    %106 = tpu.matmul %104, %105, %cst_54 {dimension_numbers = #tpu.dot_dimension_numbers<[1], [1], [0], [0], [0, 0, 1, 0], [], []>} : vector<6x128xbf16>, vector<128x128xbf16>, vector<6x128xf32> -> vector<6x128xf32>
    %107 = vector.broadcast %3 : f32 to vector<6x128xf32>
    %108 = arith.addf %106, %107 : vector<6x128xf32>
    %109 = vector.broadcast %2 : f32 to vector<6x128xf32>
    %110 = arith.mulf %109, %108 : vector<6x128xf32>
    %c1_55 = arith.constant 1 : index
    %c0_56 = arith.constant 0 : index
    %c0_57 = arith.constant 0 : index
    %111 = vector.load %arg7[%c1_55, %c0_56, %c0_57] : memref<2x6x128xf32, #tpu.memory_space<vmem>>, vector<1x6x128xf32>
    %112 = vector.shape_cast %111 : vector<1x6x128xf32> to vector<6x128xf32>
    %113 = vector.shape_cast %110 : vector<6x128xf32> to vector<1x6x128xf32>
    tpu.vector_store %arg7[%c1_55, %c0_56, %c0_57], %113 {strides = array<i32>} : memref<2x6x128xf32, #tpu.memory_space<vmem>>, vector<1x6x128xf32>,
    return
  }
}

</mosaic_0001>

<llo_original>
// kernel: protonet_forward.1
$region0: #{protonet_forward.1}
  #allocation0 [shape = 'u32[]', space=smem, size = 0x4, offset = 0x4, fixed_abs, tag = 'smem constant byte address 0x4 - core index']
  #allocation1 [shape = 'u32[144,128]{1,0:T(1,128)}', space=vmem, size = 0x12000, scoped, tag = 'internal scratch']
  #allocation2 [shape = 'bf16[128,128]{1,0:T(16,128)(2,1)}', space=vmem, size = 0x8000, scoped, tag = 'scratch operand']
  #allocation3 [shape = 'f32[1]{0:T(128)S(6)}', space=smem, size = 0x200, scoped, tag = 'scoped memory for protonet_forward.1']
  #allocation4 [shape = 'f32[1]{0:T(128)S(6)}', space=smem, size = 0x200, scoped, tag = 'scoped memory for protonet_forward.1']
  %s0 = inlined_call_operand.vmem [shape: s32[2,1,10], index: 0, kind: input, shape index: {}]
  %s1 = inlined_call_operand.vmem [shape: f32[2,10,1024], index: 1, kind: input, shape index: {}]
  %s2 = inlined_call_operand.vmem [shape: f32[2,6,1024], index: 2, kind: input, shape index: {}]
  %s3 = inlined_call_operand.vmem [shape: bf16[1024,128], index: 3, kind: input, shape index: {}]
  %s4 = inlined_call_operand.vmem [shape: f32[1,128], index: 4, kind: input, shape index: {}]
  %s5 = inlined_call_operand.<no memory space> [shape: f32[1], index: 5, kind: input, shape index: {}]
  %s6 = inlined_call_operand.<no memory space> [shape: f32[1], index: 6, kind: input, shape index: {}]
  %s7 = inlined_call_operand.vmem [shape: f32[2,6,128], index: 7, kind: output, shape index: {}]
  %s8 = sld [smem:[#allocation0]]
  $region38: #{protonet_forward.1} parent=0
    _
  %s10 = ssub.s32 1, %s8
  %s11 = scalar_select 0, %s10, %s8
  %12 = sst [smem:[#allocation3]] %s5
  %13 = sst [smem:[#allocation4]] %s6
  // Predicated region
  $region2: #{protonet_forward.1} parent=0 // pred_check
    _
  $region3: #{protonet_forward.1} parent=0 // pred_check_branch
    %15 = sbr.rel (0) target = $region5
  $region4: #{protonet_forward.1} parent=0 // pred_region
    _
  $region5: #{protonet_forward.1} parent=0 // pred_fallthru
    _
  // Predicated region
  $region6: #{protonet_forward.1} parent=0 // pred_check
    _
  $region7: #{protonet_forward.1} parent=0 // pred_check_branch
    %17 = sbr.rel (0) target = $region9
  $region8: #{protonet_forward.1} parent=0 // pred_region
    _
  $region9: #{protonet_forward.1} parent=0 // pred_fallthru
    _
  // Predicated region
  $region10: #{protonet_forward.1} parent=0 // pred_check
    _
  $region11: #{protonet_forward.1} parent=0 // pred_check_branch
    %19 = sbr.rel (0) target = $region13
  $region12: #{protonet_forward.1} parent=0 // pred_region
    _
  $region13: #{protonet_forward.1} parent=0 // pred_fallthru
    _
  // Predicated region
  $region14: #{protonet_forward.1} parent=0 // pred_check
    _
  $region15: #{protonet_forward.1} parent=0 // pred_check_branch
    %21 = sbr.rel (0) target = $region17
  $region16: #{protonet_forward.1} parent=0 // pred_region
    _
  $region17: #{protonet_forward.1} parent=0 // pred_fallthru
    _
  // Predicated region
  $region18: #{protonet_forward.1} parent=0 // pred_check
    _
  $region19: #{protonet_forward.1} parent=0 // pred_check_branch
    %23 = sbr.rel (0) target = $region21
  $region20: #{protonet_forward.1} parent=0 // pred_region
    _
  $region21: #{protonet_forward.1} parent=0 // pred_fallthru
    _
  // Predicated region
  $region22: #{protonet_forward.1} parent=0 // pred_check
    _
  $region23: #{protonet_forward.1} parent=0 // pred_check_branch
    %25 = sbr.rel (0) target = $region25
  $region24: #{protonet_forward.1} parent=0 // pred_region
    _
  $region25: #{protonet_forward.1} parent=0 // pred_fallthru
    _
  // Predicated region
  $region26: #{protonet_forward.1} parent=0 // pred_check
    _
  $region27: #{protonet_forward.1} parent=0 // pred_check_branch
    %27 = sbr.rel (0) target = $region29
  $region28: #{protonet_forward.1} parent=0 // pred_region
    _
  $region29: #{protonet_forward.1} parent=0 // pred_fallthru
    _
  %v29 = vld [vmem:[%s3] sm:$0xf]
  %v30 = vld [vmem:[%s3 + $0x4] sm:$0xf]
  %v31 = vld [vmem:[%s3 + $0x8] sm:$0xf]
  %v32 = vld [vmem:[%s3 + $0xc] sm:$0xf]
  %v33 = vld [vmem:[%s3 + $0x10] sm:$0xf]
  %v34 = vld [vmem:[%s3 + $0x14] sm:$0xf]
  %v35 = vld [vmem:[%s3 + $0x18] sm:$0xf]
  %v36 = vld [vmem:[%s3 + $0x1c] sm:$0xf]
  %v37 = vld [vmem:[%s3 + $0x20] sm:$0xf]
  %v38 = vld [vmem:[%s3 + $0x24] sm:$0xf]
  %v39 = vld [vmem:[%s3 + $0x28] sm:$0xf]
  %v40 = vld [vmem:[%s3 + $0x2c] sm:$0xf]
  %v41 = vld [vmem:[%s3 + $0x30] sm:$0xf]
  %v42 = vld [vmem:[%s3 + $0x34] sm:$0xf]
  %v43 = vld [vmem:[%s3 + $0x38] sm:$0xf]
  %v44 = vld [vmem:[%s3 + $0x3c] sm:$0xf]
  %v45 = vld [vmem:[%s3 + $0x40] sm:$0xf]
  %v46 = vld [vmem:[%s3 + $0x44] sm:$0xf]
  %v47 = vld [vmem:[%s3 + $0x48] sm:$0xf]
  %v48 = vld [vmem:[%s3 + $0x4c] sm:$0xf]
  %v49 = vld [vmem:[%s3 + $0x50] sm:$0xf]
  %v50 = vld [vmem:[%s3 + $0x54] sm:$0xf]
  %v51 = vld [vmem:[%s3 + $0x58] sm:$0xf]
  %v52 = vld [vmem:[%s3 + $0x5c] sm:$0xf]
  %v53 = vld [vmem:[%s3 + $0x60] sm:$0xf]
  %v54 = vld [vmem:[%s3 + $0x64] sm:$0xf]
  %v55 = vld [vmem:[%s3 + $0x68] sm:$0xf]
  %v56 = vld [vmem:[%s3 + $0x6c] sm:$0xf]
  %v57 = vld [vmem:[%s3 + $0x70] sm:$0xf]
  %v58 = vld [vmem:[%s3 + $0x74] sm:$0xf]
  %v59 = vld [vmem:[%s3 + $0x78] sm:$0xf]
  %v60 = vld [vmem:[%s3 + $0x7c] sm:$0xf]
  %v61 = vld [vmem:[%s3 + $0x80] sm:$0xf]
  %v62 = vld [vmem:[%s3 + $0x84] sm:$0xf]
  %v63 = vld [vmem:[%s3 + $0x88] sm:$0xf]
  %v64 = vld [vmem:[%s3 + $0x8c] sm:$0xf]
  %v65 = vld [vmem:[%s3 + $0x90] sm:$0xf]
  %v66 = vld [vmem:[%s3 + $0x94] sm:$0xf]
  %v67 = vld [vmem:[%s3 + $0x98] sm:$0xf]
  %v68 = vld [vmem:[%s3 + $0x9c] sm:$0xf]
  %v69 = vld [vmem:[%s3 + $0xa0] sm:$0xf]
  %v70 = vld [vmem:[%s3 + $0xa4] sm:$0xf]
  %v71 = vld [vmem:[%s3 + $0xa8] sm:$0xf]
  %v72 = vld [vmem:[%s3 + $0xac] sm:$0xf]
  %v73 = vld [vmem:[%s3 + $0xb0] sm:$0xf]
  %v74 = vld [vmem:[%s3 + $0xb4] sm:$0xf]
  %v75 = vld [vmem:[%s3 + $0xb8] sm:$0xf]
  %v76 = vld [vmem:[%s3 + $0xbc] sm:$0xf]
  %v77 = vld [vmem:[%s3 + $0xc0] sm:$0xf]
  %v78 = vld [vmem:[%s3 + $0xc4] sm:$0xf]
  %v79 = vld [vmem:[%s3 + $0xc8] sm:$0xf]
  %v80 = vld [vmem:[%s3 + $0xcc] sm:$0xf]
  %v81 = vld [vmem:[%s3 + $0xd0] sm:$0xf]
  %v82 = vld [vmem:[%s3 + $0xd4] sm:$0xf]
  %v83 = vld [vmem:[%s3 + $0xd8] sm:$0xf]
  %v84 = vld [vmem:[%s3 + $0xdc] sm:$0xf]
  %v85 = vld [vmem:[%s3 + $0xe0] sm:$0xf]
  %v86 = vld [vmem:[%s3 + $0xe4] sm:$0xf]
  %v87 = vld [vmem:[%s3 + $0xe8] sm:$0xf]
  %v88 = vld [vmem:[%s3 + $0xec] sm:$0xf]
  %v89 = vld [vmem:[%s3 + $0xf0] sm:$0xf]
  %v90 = vld [vmem:[%s3 + $0xf4] sm:$0xf]
  %v91 = vld [vmem:[%s3 + $0xf8] sm:$0xf]
  %v92 = vld [vmem:[%s3 + $0xfc] sm:$0xf]
  %v93 = vld [vmem:[%s3 + $0x100] sm:$0xf]
  %v94 = vld [vmem:[%s3 + $0x104] sm:$0xf]
  %v95 = vld [vmem:[%s3 + $0x108] sm:$0xf]
  %v96 = vld [vmem:[%s3 + $0x10c] sm:$0xf]
  %v97 = vld [vmem:[%s3 + $0x110] sm:$0xf]
  %v98 = vld [vmem:[%s3 + $0x114] sm:$0xf]
  %v99 = vld [vmem:[%s3 + $0x118] sm:$0xf]
  %v100 = vld [vmem:[%s3 + $0x11c] sm:$0xf]
  %v101 = vld [vmem:[%s3 + $0x120] sm:$0xf]
  %v102 = vld [vmem:[%s3 + $0x124] sm:$0xf]
  %v103 = vld [vmem:[%s3 + $0x128] sm:$0xf]
  %v104 = vld [vmem:[%s3 + $0x12c] sm:$0xf]
  %v105 = vld [vmem:[%s3 + $0x130] sm:$0xf]
  %v106 = vld [vmem:[%s3 + $0x134] sm:$0xf]
  %v107 = vld [vmem:[%s3 + $0x138] sm:$0xf]
  %v108 = vld [vmem:[%s3 + $0x13c] sm:$0xf]
  %v109 = vld [vmem:[%s3 + $0x140] sm:$0xf]
  %v110 = vld [vmem:[%s3 + $0x144] sm:$0xf]
  %v111 = vld [vmem:[%s3 + $0x148] sm:$0xf]
  %v112 = vld [vmem:[%s3 + $0x14c] sm:$0xf]
  %v113 = vld [vmem:[%s3 + $0x150] sm:$0xf]
  %v114 = vld [vmem:[%s3 + $0x154] sm:$0xf]
  %v115 = vld [vmem:[%s3 + $0x158] sm:$0xf]
  %v116 = vld [vmem:[%s3 + $0x15c] sm:$0xf]
  %v117 = vld [vmem:[%s3 + $0x160] sm:$0xf]
  %v118 = vld [vmem:[%s3 + $0x164] sm:$0xf]
  %v119 = vld [vmem:[%s3 + $0x168] sm:$0xf]
  %v120 = vld [vmem:[%s3 + $0x16c] sm:$0xf]
  %v121 = vld [vmem:[%s3 + $0x170] sm:$0xf]
  %v122 = vld [vmem:[%s3 + $0x174] sm:$0xf]
  %v123 = vld [vmem:[%s3 + $0x178] sm:$0xf]
  %v124 = vld [vmem:[%s3 + $0x17c] sm:$0xf]
  %v125 = vld [vmem:[%s3 + $0x180] sm:$0xf]
  %v126 = vld [vmem:[%s3 + $0x184] sm:$0xf]
  %v127 = vld [vmem:[%s3 + $0x188] sm:$0xf]
  %v128 = vld [vmem:[%s3 + $0x18c] sm:$0xf]
  %v129 = vld [vmem:[%s3 + $0x190] sm:$0xf]
  %v130 = vld [vmem:[%s3 + $0x194] sm:$0xf]
  %v131 = vld [vmem:[%s3 + $0x198] sm:$0xf]
  %v132 = vld [vmem:[%s3 + $0x19c] sm:$0xf]
  %v133 = vld [vmem:[%s3 + $0x1a0] sm:$0xf]
  %v134 = vld [vmem:[%s3 + $0x1a4] sm:$0xf]
  %v135 = vld [vmem:[%s3 + $0x1a8] sm:$0xf]
  %v136 = vld [vmem:[%s3 + $0x1ac] sm:$0xf]
  %v137 = vld [vmem:[%s3 + $0x1b0] sm:$0xf]
  %v138 = vld [vmem:[%s3 + $0x1b4] sm:$0xf]
  %v139 = vld [vmem:[%s3 + $0x1b8] sm:$0xf]
  %v140 = vld [vmem:[%s3 + $0x1bc] sm:$0xf]
  %v141 = vld [vmem:[%s3 + $0x1c0] sm:$0xf]
  %v142 = vld [vmem:[%s3 + $0x1c4] sm:$0xf]
  %v143 = vld [vmem:[%s3 + $0x1c8] sm:$0xf]
  %v144 = vld [vmem:[%s3 + $0x1cc] sm:$0xf]
  %v145 = vld [vmem:[%s3 + $0x1d0] sm:$0xf]
  %v146 = vld [vmem:[%s3 + $0x1d4] sm:$0xf]
  %v147 = vld [vmem:[%s3 + $0x1d8] sm:$0xf]
  %v148 = vld [vmem:[%s3 + $0x1dc] sm:$0xf]
  %v149 = vld [vmem:[%s3 + $0x1e0] sm:$0xf]
  %v150 = vld [vmem:[%s3 + $0x1e4] sm:$0xf]
  %v151 = vld [vmem:[%s3 + $0x1e8] sm:$0xf]
  %v152 = vld [vmem:[%s3 + $0x1ec] sm:$0xf]
  %v153 = vld [vmem:[%s3 + $0x1f0] sm:$0xf]
  %v154 = vld [vmem:[%s3 + $0x1f4] sm:$0xf]
  %v155 = vld [vmem:[%s3 + $0x1f8] sm:$0xf]
  %v156 = vld [vmem:[%s3 + $0x1fc] sm:$0xf]
  %v157 = vld [vmem:[%s4] sm:$0x1]
  %s158 = sld [smem:[#allocation3]]
  %s159 = sld [smem:[#allocation4]]
  %160 = vst [vmem:[#allocation2] sm:$0xff] 0
  %161 = vst [vmem:[#allocation2 + $0x8] sm:$0xff] 0
  %162 = vst [vmem:[#allocation2 + $0x10] sm:$0xff] 0
  %163 = vst [vmem:[#allocation2 + $0x18] sm:$0xff] 0
  %164 = vst [vmem:[#allocation2 + $0x20] sm:$0xff] 0
  %165 = vst [vmem:[#allocation2 + $0x28] sm:$0xff] 0
  %166 = vst [vmem:[#allocation2 + $0x30] sm:$0xff] 0
  %167 = vst [vmem:[#allocation2 + $0x38] sm:$0xff] 0
  %v168 = vld [vmem:[%s1] sm:$0xff]
  %v169 = vld [vmem:[%s1 + $0x8] sm:$0xff]
  %v170 = vld [vmem:[%s1 + $0x10] sm:$0xff]
  %v171 = vld [vmem:[%s1 + $0x18] sm:$0xff]
  %v172 = vld [vmem:[%s1 + $0x20] sm:$0xff]
  %v173 = vld [vmem:[%s1 + $0x28] sm:$0xff]
  %v174 = vld [vmem:[%s1 + $0x30] sm:$0xff]
  %v175 = vld [vmem:[%s1 + $0x38] sm:$0xff]
  %v176 = vld [vmem:[%s1 + $0x40] sm:$0x3]
  %v177 = vld [vmem:[%s1 + $0x48] sm:$0x3]
  %v178 = vld [vmem:[%s1 + $0x50] sm:$0x3]
  %v179 = vld [vmem:[%s1 + $0x58] sm:$0x3]
  %v180 = vld [vmem:[%s1 + $0x60] sm:$0x3]
  %v181 = vld [vmem:[%s1 + $0x68] sm:$0x3]
  %v182 = vld [vmem:[%s1 + $0x70] sm:$0x3]
  %v183 = vld [vmem:[%s1 + $0x78] sm:$0x3]
  %v184 = vpack.c.bf16 %v176, %v168
  %v185 = vpack.c.bf16 %v177, %v169
  %v186 = vpack.c.bf16 %v178, %v170
  %v187 = vpack.c.bf16 %v179, %v171
  %v188 = vpack.c.bf16 %v180, %v172
  %v189 = vpack.c.bf16 %v181, %v173
  %v190 = vpack.c.bf16 %v182, %v174
  %v191 = vpack.c.bf16 %v183, %v175
  %v192 = vld [vmem:[%s2] sm:$0x3f]
  %v193 = vld [vmem:[%s2 + $0x8] sm:$0x3f]
  %v194 = vld [vmem:[%s2 + $0x10] sm:$0x3f]
  %v195 = vld [vmem:[%s2 + $0x18] sm:$0x3f]
  %v196 = vld [vmem:[%s2 + $0x20] sm:$0x3f]
  %v197 = vld [vmem:[%s2 + $0x28] sm:$0x3f]
  %v198 = vld [vmem:[%s2 + $0x30] sm:$0x3f]
  %v199 = vld [vmem:[%s2 + $0x38] sm:$0x3f]
  %v200 = vpack.c.bf16 %v192, %v192
  %v201 = vpack.c.bf16 %v193, %v193
  %v202 = vpack.c.bf16 %v194, %v194
  %v203 = vpack.c.bf16 %v195, %v195
  %v204 = vpack.c.bf16 %v196, %v196
  %v205 = vpack.c.bf16 %v197, %v197
  %v206 = vpack.c.bf16 %v198, %v198
  %v207 = vpack.c.bf16 %v199, %v199
  %v209 = vlaneseq
  %v210 = vshrl.u32 %v209, 7
  %v211 = vsub.s32 0, %v210
  %v212 = vrot.slane %v157, %v211
  %v342 = vunpack.c.l.b16 %v29
  %v343 = vunpack.c.l.b16 %v30
  %v344 = vunpack.c.l.b16 %v31
  %v345 = vunpack.c.l.b16 %v32
  %v346 = vunpack.c.l.b16 %v33
  %v347 = vunpack.c.l.b16 %v34
  %v348 = vunpack.c.l.b16 %v35
  %v349 = vunpack.c.l.b16 %v36
  %v350 = vunpack.c.l.b16 %v37
  %v351 = vunpack.c.l.b16 %v38
  %v352 = vunpack.c.l.b16 %v39
  %v353 = vunpack.c.l.b16 %v40
  %v354 = vunpack.c.l.b16 %v41
  %v355 = vunpack.c.l.b16 %v42
  %v356 = vunpack.c.l.b16 %v43
  %v357 = vunpack.c.l.b16 %v44
  %v358 = vunpack.c.l.b16 %v45
  %v359 = vunpack.c.l.b16 %v46
  %v360 = vunpack.c.l.b16 %v47
  %v361 = vunpack.c.l.b16 %v48
  %v362 = vunpack.c.l.b16 %v49
  %v363 = vunpack.c.l.b16 %v50
  %v364 = vunpack.c.l.b16 %v51
  %v365 = vunpack.c.l.b16 %v52
  %v366 = vunpack.c.l.b16 %v53
  %v367 = vunpack.c.l.b16 %v54
  %v368 = vunpack.c.l.b16 %v55
  %v369 = vunpack.c.l.b16 %v56
  %v370 = vunpack.c.l.b16 %v57
  %v371 = vunpack.c.l.b16 %v58
  %v372 = vunpack.c.l.b16 %v59
  %v373 = vunpack.c.l.b16 %v60
  %v374 = vunpack.c.l.b16 %v61
  %v375 = vunpack.c.l.b16 %v62
  %v376 = vunpack.c.l.b16 %v63
  %v377 = vunpack.c.l.b16 %v64
  %v378 = vunpack.c.l.b16 %v65
  %v379 = vunpack.c.l.b16 %v66
  %v380 = vunpack.c.l.b16 %v67
  %v381 = vunpack.c.l.b16 %v68
  %v382 = vunpack.c.l.b16 %v69
  %v383 = vunpack.c.l.b16 %v70
  %v384 = vunpack.c.l.b16 %v71
  %v385 = vunpack.c.l.b16 %v72
  %v386 = vunpack.c.l.b16 %v73
  %v387 = vunpack.c.l.b16 %v74
  %v388 = vunpack.c.l.b16 %v75
  %v389 = vunpack.c.l.b16 %v76
  %v390 = vunpack.c.l.b16 %v77
  %v391 = vunpack.c.l.b16 %v78
  %v392 = vunpack.c.l.b16 %v79
  %v393 = vunpack.c.l.b16 %v80
  %v394 = vunpack.c.l.b16 %v81
  %v395 = vunpack.c.l.b16 %v82
  %v396 = vunpack.c.l.b16 %v83
  %v397 = vunpack.c.l.b16 %v84
  %v398 = vunpack.c.l.b16 %v85
  %v399 = vunpack.c.l.b16 %v86
  %v400 = vunpack.c.l.b16 %v87
  %v401 = vunpack.c.l.b16 %v88
  %v402 = vunpack.c.l.b16 %v89
  %v403 = vunpack.c.l.b16 %v90
  %v404 = vunpack.c.l.b16 %v91
  %v405 = vunpack.c.l.b16 %v92
  %v406 = vunpack.c.l.b16 %v93
  %v407 = vunpack.c.l.b16 %v94
  %v408 = vunpack.c.l.b16 %v95
  %v409 = vunpack.c.l.b16 %v96
  %v410 = vunpack.c.l.b16 %v97
  %v411 = vunpack.c.l.b16 %v98
  %v412 = vunpack.c.l.b16 %v99
  %v413 = vunpack.c.l.b16 %v100
  %v414 = vunpack.c.l.b16 %v101
  %v415 = vunpack.c.l.b16 %v102
  %v416 = vunpack.c.l.b16 %v103
  %v417 = vunpack.c.l.b16 %v104
  %v418 = vunpack.c.l.b16 %v105
  %v419 = vunpack.c.l.b16 %v106
  %v420 = vunpack.c.l.b16 %v107
  %v421 = vunpack.c.l.b16 %v108
  %v422 = vunpack.c.l.b16 %v109
  %v423 = vunpack.c.l.b16 %v110
  %v424 = vunpack.c.l.b16 %v111
  %v425 = vunpack.c.l.b16 %v112
  %v426 = vunpack.c.l.b16 %v113
  %v427 = vunpack.c.l.b16 %v114
  %v428 = vunpack.c.l.b16 %v115
  %v429 = vunpack.c.l.b16 %v116
  %v430 = vunpack.c.l.b16 %v117
  %v431 = vunpack.c.l.b16 %v118
  %v432 = vunpack.c.l.b16 %v119
  %v433 = vunpack.c.l.b16 %v120
  %v434 = vunpack.c.l.b16 %v121
  %v435 = vunpack.c.l.b16 %v122
  %v436 = vunpack.c.l.b16 %v123
  %v437 = vunpack.c.l.b16 %v124
  %v438 = vunpack.c.l.b16 %v125
  %v439 = vunpack.c.l.b16 %v126
  %v440 = vunpack.c.l.b16 %v127
  %v441 = vunpack.c.l.b16 %v128
  %v442 = vunpack.c.l.b16 %v129
  %v443 = vunpack.c.l.b16 %v130
  %v444 = vunpack.c.l.b16 %v131
  %v445 = vunpack.c.l.b16 %v132
  %v446 = vunpack.c.l.b16 %v133
  %v447 = vunpack.c.l.b16 %v134
  %v448 = vunpack.c.l.b16 %v135
  %v449 = vunpack.c.l.b16 %v136
  %v450 = vunpack.c.l.b16 %v137
  %v451 = vunpack.c.l.b16 %v138
  %v452 = vunpack.c.l.b16 %v139
  %v453 = vunpack.c.l.b16 %v140
  %v454 = vunpack.c.l.b16 %v141
  %v455 = vunpack.c.l.b16 %v142
  %v456 = vunpack.c.l.b16 %v143
  %v457 = vunpack.c.l.b16 %v144
  %v458 = vunpack.c.l.b16 %v145
  %v459 = vunpack.c.l.b16 %v146
  %v460 = vunpack.c.l.b16 %v147
  %v461 = vunpack.c.l.b16 %v148
  %v462 = vunpack.c.l.b16 %v149
  %v463 = vunpack.c.l.b16 %v150
  %v464 = vunpack.c.l.b16 %v151
  %v465 = vunpack.c.l.b16 %v152
  %v466 = vunpack.c.l.b16 %v153
  %v467 = vunpack.c.l.b16 %v154
  %v468 = vunpack.c.l.b16 %v155
  %v469 = vunpack.c.l.b16 %v156
  %v470 = vpack.c.b16 %v343, %v342
  %v471 = vpack.c.b16 %v345, %v344
  %v472 = vpack.c.b16 %v347, %v346
  %v473 = vpack.c.b16 %v349, %v348
  %v474 = vpack.c.b16 %v351, %v350
  %v475 = vpack.c.b16 %v353, %v352
  %v476 = vpack.c.b16 %v355, %v354
  %v477 = vpack.c.b16 %v357, %v356
  %v478 = vpack.c.b16 %v359, %v358
  %v479 = vpack.c.b16 %v361, %v360
  %v480 = vpack.c.b16 %v363, %v362
  %v481 = vpack.c.b16 %v365, %v364
  %v482 = vpack.c.b16 %v367, %v366
  %v483 = vpack.c.b16 %v369, %v368
  %v484 = vpack.c.b16 %v371, %v370
  %v485 = vpack.c.b16 %v373, %v372
  %v486 = vpack.c.b16 %v375, %v374
  %v487 = vpack.c.b16 %v377, %v376
  %v488 = vpack.c.b16 %v379, %v378
  %v489 = vpack.c.b16 %v381, %v380
  %v490 = vpack.c.b16 %v383, %v382
  %v491 = vpack.c.b16 %v385, %v384
  %v492 = vpack.c.b16 %v387, %v386
  %v493 = vpack.c.b16 %v389, %v388
  %v494 = vpack.c.b16 %v391, %v390
  %v495 = vpack.c.b16 %v393, %v392
  %v496 = vpack.c.b16 %v395, %v394
  %v497 = vpack.c.b16 %v397, %v396
  %v498 = vpack.c.b16 %v399, %v398
  %v499 = vpack.c.b16 %v401, %v400
  %v500 = vpack.c.b16 %v403, %v402
  %v501 = vpack.c.b16 %v405, %v404
  %v502 = vpack.c.b16 %v407, %v406
  %v503 = vpack.c.b16 %v409, %v408
  %v504 = vpack.c.b16 %v411, %v410
  %v505 = vpack.c.b16 %v413, %v412
  %v506 = vpack.c.b16 %v415, %v414
  %v507 = vpack.c.b16 %v417, %v416
  %v508 = vpack.c.b16 %v419, %v418
  %v509 = vpack.c.b16 %v421, %v420
  %v510 = vpack.c.b16 %v423, %v422
  %v511 = vpack.c.b16 %v425, %v424
  %v512 = vpack.c.b16 %v427, %v426
  %v513 = vpack.c.b16 %v429, %v428
  %v514 = vpack.c.b16 %v431, %v430
  %v515 = vpack.c.b16 %v433, %v432
  %v516 = vpack.c.b16 %v435, %v434
  %v517 = vpack.c.b16 %v437, %v436
  %v518 = vpack.c.b16 %v439, %v438
  %v519 = vpack.c.b16 %v441, %v440
  %v520 = vpack.c.b16 %v443, %v442
  %v521 = vpack.c.b16 %v445, %v444
  %v522 = vpack.c.b16 %v447, %v446
  %v523 = vpack.c.b16 %v449, %v448
  %v524 = vpack.c.b16 %v451, %v450
  %v525 = vpack.c.b16 %v453, %v452
  %v526 = vpack.c.b16 %v455, %v454
  %v527 = vpack.c.b16 %v457, %v456
  %v528 = vpack.c.b16 %v459, %v458
  %v529 = vpack.c.b16 %v461, %v460
  %v530 = vpack.c.b16 %v463, %v462
  %v531 = vpack.c.b16 %v465, %v464
  %v532 = vpack.c.b16 %v467, %v466
  %v533 = vpack.c.b16 %v469, %v468
  %598 = vmatprep.subr.bf16.mxu0 0
  %599 = vmatpush1.bf16.msra.mxu0 %v470
  %600 = vmatprep.subr.bf16.mxu0 0
  %601 = vmatpush1.bf16.msra.mxu0 %v471
  %602 = vmatprep.subr.bf16.mxu0 0
  %603 = vmatpush1.bf16.msra.mxu0 %v472
  %604 = vmatprep.subr.bf16.mxu0 0
  %605 = vmatpush1.bf16.msra.mxu0 %v473
  %606 = vmatprep.subr.bf16.mxu0 0
  %607 = vmatpush1.bf16.msra.mxu0 %v474
  %608 = vmatprep.subr.bf16.mxu0 0
  %609 = vmatpush1.bf16.msra.mxu0 %v475
  %610 = vmatprep.subr.bf16.mxu0 0
  %611 = vmatpush1.bf16.msra.mxu0 %v476
  %612 = vmatprep.subr.bf16.mxu0 0
  %613 = vmatpush1.bf16.msra.mxu0 %v477
  %614 = vmatprep.subr.bf16.mxu0 0
  %615 = vmatpush1.bf16.msra.mxu0 %v478
  %616 = vmatprep.subr.bf16.mxu0 0
  %617 = vmatpush1.bf16.msra.mxu0 %v479
  %618 = vmatprep.subr.bf16.mxu0 0
  %619 = vmatpush1.bf16.msra.mxu0 %v480
  %620 = vmatprep.subr.bf16.mxu0 0
  %621 = vmatpush1.bf16.msra.mxu0 %v481
  %622 = vmatprep.subr.bf16.mxu0 0
  %623 = vmatpush1.bf16.msra.mxu0 %v482
  %624 = vmatprep.subr.bf16.mxu0 0
  %625 = vmatpush1.bf16.msra.mxu0 %v483
  %626 = vmatprep.subr.bf16.mxu0 0
  %627 = vmatpush1.bf16.msra.mxu0 %v484
  %628 = vmatprep.subr.bf16.mxu0 0
  %629 = vmatpush1.bf16.msra.mxu0 %v485
  %630 = vmatprep.mubr.bf16.mxu0 %v185
  %631 = vmatmul.mubr.bf16.gmra.mrb[0].mxu0 %v184
  %v632 = vpop.f32.mrb[0].mxu0
  %v633 = vadd.f32 %v212, %v632
  %v634 = vpop.f32.mrb[0].mxu0
  %v635 = vpop.f32.mrb[0].mxu0
  %v636 = vadd.f32 %v212, %v635
  %v637 = vpop.f32.mrb[0].mxu0
  %638 = vdwg.mxu0
  %639 = vmatprep.subr.bf16.mxu0 0
  %640 = vmatpush1.bf16.msra.mxu0 %v486
  %641 = vmatprep.subr.bf16.mxu0 0
  %642 = vmatpush1.bf16.msra.mxu0 %v487
  %643 = vmatprep.subr.bf16.mxu0 0
  %644 = vmatpush1.bf16.msra.mxu0 %v488
  %645 = vmatprep.subr.bf16.mxu0 0
  %646 = vmatpush1.bf16.msra.mxu0 %v489
  %647 = vmatprep.subr.bf16.mxu0 0
  %648 = vmatpush1.bf16.msra.mxu0 %v490
  %649 = vmatprep.subr.bf16.mxu0 0
  %650 = vmatpush1.bf16.msra.mxu0 %v491
  %651 = vmatprep.subr.bf16.mxu0 0
  %652 = vmatpush1.bf16.msra.mxu0 %v492
  %653 = vmatprep.subr.bf16.mxu0 0
  %654 = vmatpush1.bf16.msra.mxu0 %v493
  %655 = vmatprep.subr.bf16.mxu0 0
  %656 = vmatpush1.bf16.msra.mxu0 %v494
  %657 = vmatprep.subr.bf16.mxu0 0
  %658 = vmatpush1.bf16.msra.mxu0 %v495
  %659 = vmatprep.subr.bf16.mxu0 0
  %660 = vmatpush1.bf16.msra.mxu0 %v496
  %661 = vmatprep.subr.bf16.mxu0 0
  %662 = vmatpush1.bf16.msra.mxu0 %v497
  %663 = vmatprep.subr.bf16.mxu0 0
  %664 = vmatpush1.bf16.msra.mxu0 %v498
  %665 = vmatprep.subr.bf16.mxu0 0
  %666 = vmatpush1.bf16.msra.mxu0 %v499
  %667 = vmatprep.subr.bf16.mxu0 0
  %668 = vmatpush1.bf16.msra.mxu0 %v500
  %669 = vmatprep.subr.bf16.mxu0 0
  %670 = vmatpush1.bf16.msra.mxu0 %v501
  %671 = vmatprep.mubr.bf16.mxu0 %v187
  %672 = vmatmul.mubr.bf16.gmra.mrb[0].mxu0 %v186
  %v673 = vpop.f32.mrb[0].mxu0
  %v674 = vadd.f32 %v633, %v673
  %v675 = vpop.f32.mrb[0].mxu0
  %v676 = vpop.f32.mrb[0].mxu0
  %v677 = vadd.f32 %v636, %v676
  %v678 = vpop.f32.mrb[0].mxu0
  %679 = vdwg.mxu0
  %680 = vmatprep.subr.bf16.mxu0 0
  %681 = vmatpush1.bf16.msra.mxu0 %v502
  %682 = vmatprep.subr.bf16.mxu0 0
  %683 = vmatpush1.bf16.msra.mxu0 %v503
  %684 = vmatprep.subr.bf16.mxu0 0
  %685 = vmatpush1.bf16.msra.mxu0 %v504
  %686 = vmatprep.subr.bf16.mxu0 0
  %687 = vmatpush1.bf16.msra.mxu0 %v505
  %688 = vmatprep.subr.bf16.mxu0 0
  %689 = vmatpush1.bf16.msra.mxu0 %v506
  %690 = vmatprep.subr.bf16.mxu0 0
  %691 = vmatpush1.bf16.msra.mxu0 %v507
  %692 = vmatprep.subr.bf16.mxu0 0
  %693 = vmatpush1.bf16.msra.mxu0 %v508
  %694 = vmatprep.subr.bf16.mxu0 0
  %695 = vmatpush1.bf16.msra.mxu0 %v509
  %696 = vmatprep.subr.bf16.mxu0 0
  %697 = vmatpush1.bf16.msra.mxu0 %v510
  %698 = vmatprep.subr.bf16.mxu0 0
  %699 = vmatpush1.bf16.msra.mxu0 %v511
  %700 = vmatprep.subr.bf16.mxu0 0
  %701 = vmatpush1.bf16.msra.mxu0 %v512
  %702 = vmatprep.subr.bf16.mxu0 0
  %703 = vmatpush1.bf16.msra.mxu0 %v513
  %704 = vmatprep.subr.bf16.mxu0 0
  %705 = vmatpush1.bf16.msra.mxu0 %v514
  %706 = vmatprep.subr.bf16.mxu0 0
  %707 = vmatpush1.bf16.msra.mxu0 %v515
  %708 = vmatprep.subr.bf16.mxu0 0
  %709 = vmatpush1.bf16.msra.mxu0 %v516
  %710 = vmatprep.subr.bf16.mxu0 0
  %711 = vmatpush1.bf16.msra.mxu0 %v517
  %712 = vmatprep.mubr.bf16.mxu0 %v189
  %713 = vmatmul.mubr.bf16.gmra.mrb[0].mxu0 %v188
  %v714 = vpop.f32.mrb[0].mxu0
  %v715 = vadd.f32 %v674, %v714
  %v716 = vpop.f32.mrb[0].mxu0
  %v717 = vpop.f32.mrb[0].mxu0
  %v718 = vadd.f32 %v677, %v717
  %v719 = vpop.f32.mrb[0].mxu0
  %720 = vdwg.mxu0
  %721 = vmatprep.subr.bf16.mxu0 0
  %722 = vmatpush1.bf16.msra.mxu0 %v518
  %723 = vmatprep.subr.bf16.mxu0 0
  %724 = vmatpush1.bf16.msra.mxu0 %v519
  %725 = vmatprep.subr.bf16.mxu0 0
  %726 = vmatpush1.bf16.msra.mxu0 %v520
  %727 = vmatprep.subr.bf16.mxu0 0
  %728 = vmatpush1.bf16.msra.mxu0 %v521
  %729 = vmatprep.subr.bf16.mxu0 0
  %730 = vmatpush1.bf16.msra.mxu0 %v522
  %731 = vmatprep.subr.bf16.mxu0 0
  %732 = vmatpush1.bf16.msra.mxu0 %v523
  %733 = vmatprep.subr.bf16.mxu0 0
  %734 = vmatpush1.bf16.msra.mxu0 %v524
  %735 = vmatprep.subr.bf16.mxu0 0
  %736 = vmatpush1.bf16.msra.mxu0 %v525
  %737 = vmatprep.subr.bf16.mxu0 0
  %738 = vmatpush1.bf16.msra.mxu0 %v526
  %739 = vmatprep.subr.bf16.mxu0 0
  %740 = vmatpush1.bf16.msra.mxu0 %v527
  %741 = vmatprep.subr.bf16.mxu0 0
  %742 = vmatpush1.bf16.msra.mxu0 %v528
  %743 = vmatprep.subr.bf16.mxu0 0
  %744 = vmatpush1.bf16.msra.mxu0 %v529
  %745 = vmatprep.subr.bf16.mxu0 0
  %746 = vmatpush1.bf16.msra.mxu0 %v530
  %747 = vmatprep.subr.bf16.mxu0 0
  %748 = vmatpush1.bf16.msra.mxu0 %v531
  %749 = vmatprep.subr.bf16.mxu0 0
  %750 = vmatpush1.bf16.msra.mxu0 %v532
  %751 = vmatprep.subr.bf16.mxu0 0
  %752 = vmatpush1.bf16.msra.mxu0 %v533
  %753 = vmatprep.mubr.bf16.mxu0 %v191
  %754 = vmatmul.mubr.bf16.gmra.mrb[0].mxu0 %v190
  %v755 = vpop.f32.mrb[0].mxu0
  %v756 = vadd.f32 %v715, %v755
  %v757 = vpop.f32.mrb[0].mxu0
  %v758 = vpop.f32.mrb[0].mxu0
  %v759 = vadd.f32 %v718, %v758
  %v760 = vpop.f32.mrb[0].mxu0
  %761 = vdwg.mxu0
  %v762 = vmax.f32 %v756, 0.0
  %v763 = vmax.f32 %v759, 0.0
  %764 = vmatprep.subr.bf16.mxu0 0
  %765 = vmatpush1.bf16.msra.mxu0 %v470
  %766 = vmatprep.subr.bf16.mxu0 0
  %767 = vmatpush1.bf16.msra.mxu0 %v471
  %768 = vmatprep.subr.bf16.mxu0 0
  %769 = vmatpush1.bf16.msra.mxu0 %v472
  %770 = vmatprep.subr.bf16.mxu0 0
  %771 = vmatpush1.bf16.msra.mxu0 %v473
  %772 = vmatprep.subr.bf16.mxu0 0
  %773 = vmatpush1.bf16.msra.mxu0 %v474
  %774 = vmatprep.subr.bf16.mxu0 0
  %775 = vmatpush1.bf16.msra.mxu0 %v475
  %776 = vmatprep.subr.bf16.mxu0 0
  %777 = vmatpush1.bf16.msra.mxu0 %v476
  %778 = vmatprep.subr.bf16.mxu0 0
  %779 = vmatpush1.bf16.msra.mxu0 %v477
  %780 = vmatprep.subr.bf16.mxu0 0
  %781 = vmatpush1.bf16.msra.mxu0 %v478
  %782 = vmatprep.subr.bf16.mxu0 0
  %783 = vmatpush1.bf16.msra.mxu0 %v479
  %784 = vmatprep.subr.bf16.mxu0 0
  %785 = vmatpush1.bf16.msra.mxu0 %v480
  %786 = vmatprep.subr.bf16.mxu0 0
  %787 = vmatpush1.bf16.msra.mxu0 %v481
  %788 = vmatprep.subr.bf16.mxu0 0
  %789 = vmatpush1.bf16.msra.mxu0 %v482
  %790 = vmatprep.subr.bf16.mxu0 0
  %791 = vmatpush1.bf16.msra.mxu0 %v483
  %792 = vmatprep.subr.bf16.mxu0 0
  %793 = vmatpush1.bf16.msra.mxu0 %v484
  %794 = vmatprep.subr.bf16.mxu0 0
  %795 = vmatpush1.bf16.msra.mxu0 %v485
  %796 = vmatprep.mubr.bf16.mxu0 %v201
  %797 = vmatmul.mubr.bf16.gmra.mrb[0].mxu0 %v200
  %v798 = vpop.f32.mrb[0].mxu0
  %v799 = vadd.f32 %v212, %v798
  %v800 = vpop.f32.mrb[0].mxu0
  %v801 = vpop.f32.mrb[0].mxu0
  %v802 = vpop.f32.mrb[0].mxu0
  %803 = vdwg.mxu0
  %804 = vmatprep.subr.bf16.mxu0 0
  %805 = vmatpush1.bf16.msra.mxu0 %v486
  %806 = vmatprep.subr.bf16.mxu0 0
  %807 = vmatpush1.bf16.msra.mxu0 %v487
  %808 = vmatprep.subr.bf16.mxu0 0
  %809 = vmatpush1.bf16.msra.mxu0 %v488
  %810 = vmatprep.subr.bf16.mxu0 0
  %811 = vmatpush1.bf16.msra.mxu0 %v489
  %812 = vmatprep.subr.bf16.mxu0 0
  %813 = vmatpush1.bf16.msra.mxu0 %v490
  %814 = vmatprep.subr.bf16.mxu0 0
  %815 = vmatpush1.bf16.msra.mxu0 %v491
  %816 = vmatprep.subr.bf16.mxu0 0
  %817 = vmatpush1.bf16.msra.mxu0 %v492
  %818 = vmatprep.subr.bf16.mxu0 0
  %819 = vmatpush1.bf16.msra.mxu0 %v493
  %820 = vmatprep.subr.bf16.mxu0 0
  %821 = vmatpush1.bf16.msra.mxu0 %v494
  %822 = vmatprep.subr.bf16.mxu0 0
  %823 = vmatpush1.bf16.msra.mxu0 %v495
  %824 = vmatprep.subr.bf16.mxu0 0
  %825 = vmatpush1.bf16.msra.mxu0 %v496
  %826 = vmatprep.subr.bf16.mxu0 0
  %827 = vmatpush1.bf16.msra.mxu0 %v497
  %828 = vmatprep.subr.bf16.mxu0 0
  %829 = vmatpush1.bf16.msra.mxu0 %v498
  %830 = vmatprep.subr.bf16.mxu0 0
  %831 = vmatpush1.bf16.msra.mxu0 %v499
  %832 = vmatprep.subr.bf16.mxu0 0
  %833 = vmatpush1.bf16.msra.mxu0 %v500
  %834 = vmatprep.subr.bf16.mxu0 0
  %835 = vmatpush1.bf16.msra.mxu0 %v501
  %836 = vmatprep.mubr.bf16.mxu0 %v203
  %837 = vmatmul.mubr.bf16.gmra.mrb[0].mxu0 %v202
  %v838 = vpop.f32.mrb[0].mxu0
  %v839 = vadd.f32 %v799, %v838
  %v840 = vpop.f32.mrb[0].mxu0
  %v841 = vpop.f32.mrb[0].mxu0
  %v842 = vpop.f32.mrb[0].mxu0
  %843 = vdwg.mxu0
  %844 = vmatprep.subr.bf16.mxu0 0
  %845 = vmatpush1.bf16.msra.mxu0 %v502
  %846 = vmatprep.subr.bf16.mxu0 0
  %847 = vmatpush1.bf16.msra.mxu0 %v503
  %848 = vmatprep.subr.bf16.mxu0 0
  %849 = vmatpush1.bf16.msra.mxu0 %v504
  %850 = vmatprep.subr.bf16.mxu0 0
  %851 = vmatpush1.bf16.msra.mxu0 %v505
  %852 = vmatprep.subr.bf16.mxu0 0
  %853 = vmatpush1.bf16.msra.mxu0 %v506
  %854 = vmatprep.subr.bf16.mxu0 0
  %855 = vmatpush1.bf16.msra.mxu0 %v507
  %856 = vmatprep.subr.bf16.mxu0 0
  %857 = vmatpush1.bf16.msra.mxu0 %v508
  %858 = vmatprep.subr.bf16.mxu0 0
  %859 = vmatpush1.bf16.msra.mxu0 %v509
  %860 = vmatprep.subr.bf16.mxu0 0
  %861 = vmatpush1.bf16.msra.mxu0 %v510
  %862 = vmatprep.subr.bf16.mxu0 0
  %863 = vmatpush1.bf16.msra.mxu0 %v511
  %864 = vmatprep.subr.bf16.mxu0 0
  %865 = vmatpush1.bf16.msra.mxu0 %v512
  %866 = vmatprep.subr.bf16.mxu0 0
  %867 = vmatpush1.bf16.msra.mxu0 %v513
  %868 = vmatprep.subr.bf16.mxu0 0
  %869 = vmatpush1.bf16.msra.mxu0 %v514
  %870 = vmatprep.subr.bf16.mxu0 0
  %871 = vmatpush1.bf16.msra.mxu0 %v515
  %872 = vmatprep.subr.bf16.mxu0 0
  %873 = vmatpush1.bf16.msra.mxu0 %v516
  %874 = vmatprep.subr.bf16.mxu0 0
  %875 = vmatpush1.bf16.msra.mxu0 %v517
  %876 = vmatprep.mubr.bf16.mxu0 %v205
  %877 = vmatmul.mubr.bf16.gmra.mrb[0].mxu0 %v204
  %v878 = vpop.f32.mrb[0].mxu0
  %v879 = vadd.f32 %v839, %v878
  %v880 = vpop.f32.mrb[0].mxu0
  %v881 = vpop.f32.mrb[0].mxu0
  %v882 = vpop.f32.mrb[0].mxu0
  %883 = vdwg.mxu0
  %884 = vmatprep.subr.bf16.mxu0 0
  %885 = vmatpush1.bf16.msra.mxu0 %v518
  %886 = vmatprep.subr.bf16.mxu0 0
  %887 = vmatpush1.bf16.msra.mxu0 %v519
  %888 = vmatprep.subr.bf16.mxu0 0
  %889 = vmatpush1.bf16.msra.mxu0 %v520
  %890 = vmatprep.subr.bf16.mxu0 0
  %891 = vmatpush1.bf16.msra.mxu0 %v521
  %892 = vmatprep.subr.bf16.mxu0 0
  %893 = vmatpush1.bf16.msra.mxu0 %v522
  %894 = vmatprep.subr.bf16.mxu0 0
  %895 = vmatpush1.bf16.msra.mxu0 %v523
  %896 = vmatprep.subr.bf16.mxu0 0
  %897 = vmatpush1.bf16.msra.mxu0 %v524
  %898 = vmatprep.subr.bf16.mxu0 0
  %899 = vmatpush1.bf16.msra.mxu0 %v525
  %900 = vmatprep.subr.bf16.mxu0 0
  %901 = vmatpush1.bf16.msra.mxu0 %v526
  %902 = vmatprep.subr.bf16.mxu0 0
  %903 = vmatpush1.bf16.msra.mxu0 %v527
  %904 = vmatprep.subr.bf16.mxu0 0
  %905 = vmatpush1.bf16.msra.mxu0 %v528
  %906 = vmatprep.subr.bf16.mxu0 0
  %907 = vmatpush1.bf16.msra.mxu0 %v529
  %908 = vmatprep.subr.bf16.mxu0 0
  %909 = vmatpush1.bf16.msra.mxu0 %v530
  %910 = vmatprep.subr.bf16.mxu0 0
  %911 = vmatpush1.bf16.msra.mxu0 %v531
  %912 = vmatprep.subr.bf16.mxu0 0
  %913 = vmatpush1.bf16.msra.mxu0 %v532
  %914 = vmatprep.subr.bf16.mxu0 0
  %915 = vmatpush1.bf16.msra.mxu0 %v533
  %916 = vmatprep.mubr.bf16.mxu0 %v207
  %917 = vmatmul.mubr.bf16.gmra.mrb[0].mxu0 %v206
  %v918 = vpop.f32.mrb[0].mxu0
  %v919 = vadd.f32 %v879, %v918
  %v920 = vpop.f32.mrb[0].mxu0
  %v921 = vpop.f32.mrb[0].mxu0
  %v922 = vpop.f32.mrb[0].mxu0
  %923 = vdwg.mxu0
  %v924 = vmax.f32 %v919, 0.0
  %v925 = vld [vmem:[%s0] sm:$0x1]
  %v926 = vlaneseq
  %v927 = vshrl.u32 %v926, 7
  %v928 = vlaneseq
  %v929 = vshrl.u32 %v928, 7
  %v930 = vsub.s32 0, %v929
  %v931 = vrot.slane %v925, %v930
  %vm932 = vcmp.eq.s32.totalorder %v927, %v931
  %v933 = vsel %vm932, 1, 0
  %v934 = vcvt.s32.f32 %v933
  %v935 = vpack.c.bf16 %v934, %v934
  %v936 = vpack.c.bf16 %v763, %v762
  %vm937 = vcmask 80896
  %v939 = vsel %vm937, %v935, 0
  %vm941 = vcmask 1044480
  %v943 = vsel %vm941, %v936, 0
  %945 = vmatprep.subr.bf16.mxu0 0
  %946 = vmatpush1.bf16.msra.mxu0 %v943
  %947 = vmatprep.subr.bf16.mxu0 0
  %948 = vmatpush1.bf16.msra.mxu0 0
  %949 = vmatprep.subr.bf16.mxu0 0
  %950 = vmatpush1.bf16.msra.mxu0 0
  %951 = vmatprep.subr.bf16.mxu0 0
  %952 = vmatpush1.bf16.msra.mxu0 0
  %953 = vmatprep.subr.bf16.mxu0 0
  %954 = vmatpush1.bf16.msra.mxu0 0
  %955 = vmatprep.subr.bf16.mxu0 0
  %956 = vmatpush1.bf16.msra.mxu0 0
  %957 = vmatprep.subr.bf16.mxu0 0
  %958 = vmatpush1.bf16.msra.mxu0 0
  %959 = vmatprep.subr.bf16.mxu0 0
  %960 = vmatpush1.bf16.msra.mxu0 0
  %961 = vmatprep.subr.bf16.mxu0 0
  %962 = vmatpush1.bf16.msra.mxu0 0
  %963 = vmatprep.subr.bf16.mxu0 0
  %964 = vmatpush1.bf16.msra.mxu0 0
  %965 = vmatprep.subr.bf16.mxu0 0
  %966 = vmatpush1.bf16.msra.mxu0 0
  %967 = vmatprep.subr.bf16.mxu0 0
  %968 = vmatpush1.bf16.msra.mxu0 0
  %969 = vmatprep.subr.bf16.mxu0 0
  %970 = vmatpush1.bf16.msra.mxu0 0
  %971 = vmatprep.subr.bf16.mxu0 0
  %972 = vmatpush1.bf16.msra.mxu0 0
  %973 = vmatprep.subr.bf16.mxu0 0
  %974 = vmatpush1.bf16.msra.mxu0 0
  %975 = vmatprep.subr.bf16.mxu0 0
  %976 = vmatpush1.bf16.msra.mxu0 0
  %977 = vmatprep.mubr.bf16.mxu0 0
  %978 = vmatmul.mubr.bf16.gmra.mrb[0].mxu0 %v939
  %v979 = vpop.f32.mrb[0].mxu0
  %v980 = vadd.f32 0.0, %v979
  %v981 = vpop.f32.mrb[0].mxu0
  %v982 = vpop.f32.mrb[0].mxu0
  %v983 = vpop.f32.mrb[0].mxu0
  %984 = vdwg.mxu0
  %v985 = vmul.f32 %v980, %v980
  %986 = vadd.xlane.f32.xlu0 %v985
  %v987 = vpop.xlane.xlu0 %986
  %v988 = vmax.f32 %v987, 1e-24
  %v989 = vrsqrt.pop %v988
  %v990 = vmul.f32 %v980, %v989
  %v991 = vmul.f32 %v924, %v924
  %vm992 = vcmask 1045504
  %v993 = vsel %vm992, %v991, 0.0
  %994 = vadd.xlane.f32.xlu0 %v993
  %v995 = vpop.xlane.xlu0 %994
  %v996 = vmax.f32 %v995, 1e-24
  %v997 = vrsqrt.pop %v996
  %v998 = vmul.f32 %v924, %v997
  %v999 = vpack.c.bf16 %v990, %v990
  %1000 = vst [vmem:[#allocation2] sm:$0xf] %v999
  %v1001 = vpack.c.bf16 %v998, %v998
  %v1002 = vld [vmem:[#allocation2] sm:$0xff]
  %v1003 = vld [vmem:[#allocation2 + $0x8] sm:$0xff]
  %v1004 = vld [vmem:[#allocation2 + $0x10] sm:$0xff]
  %v1005 = vld [vmem:[#allocation2 + $0x18] sm:$0xff]
  %v1006 = vld [vmem:[#allocation2 + $0x20] sm:$0xff]
  %v1007 = vld [vmem:[#allocation2 + $0x28] sm:$0xff]
  %v1008 = vld [vmem:[#allocation2 + $0x30] sm:$0xff]
  %v1009 = vld [vmem:[#allocation2 + $0x38] sm:$0xff]
  %v1010 = vstv %s159
  %1011 = vmatprep.subr.bf16.mxu0 0
  %1012 = vmatpush1.bf16.xpose.msra.mxu0 %v1002
  %1013 = vmatprep.subr.bf16.mxu0 0
  %1014 = vmatpush1.bf16.xpose.msra.mxu0 %v1003
  %1015 = vmatprep.subr.bf16.mxu0 0
  %1016 = vmatpush1.bf16.xpose.msra.mxu0 %v1004
  %1017 = vmatprep.subr.bf16.mxu0 0
  %1018 = vmatpush1.bf16.xpose.msra.mxu0 %v1005
  %1019 = vmatprep.subr.bf16.mxu0 0
  %1020 = vmatpush1.bf16.xpose.msra.mxu0 %v1006
  %1021 = vmatprep.subr.bf16.mxu0 0
  %1022 = vmatpush1.bf16.xpose.msra.mxu0 %v1007
  %1023 = vmatprep.subr.bf16.mxu0 0
  %1024 = vmatpush1.bf16.xpose.msra.mxu0 %v1008
  %1025 = vmatprep.subr.bf16.mxu0 0
  %1026 = vmatpush1.bf16.xpose.msra.mxu0 %v1009
  %1027 = vmatprep.subr.bf16.mxu0 0
  %1028 = vmatpush1.bf16.xpose.msra.mxu0 0
  %1029 = vmatprep.subr.bf16.mxu0 0
  %1030 = vmatpush1.bf16.xpose.msra.mxu0 0
  %1031 = vmatprep.subr.bf16.mxu0 0
  %1032 = vmatpush1.bf16.xpose.msra.mxu0 0
  %1033 = vmatprep.subr.bf16.mxu0 0
  %1034 = vmatpush1.bf16.xpose.msra.mxu0 0
  %1035 = vmatprep.subr.bf16.mxu0 0
  %1036 = vmatpush1.bf16.xpose.msra.mxu0 0
  %1037 = vmatprep.subr.bf16.mxu0 0
  %1038 = vmatpush1.bf16.xpose.msra.mxu0 0
  %1039 = vmatprep.subr.bf16.mxu0 0
  %1040 = vmatpush1.bf16.xpose.msra.mxu0 0
  %1041 = vmatprep.subr.bf16.mxu0 0
  %1042 = vmatpush1.bf16.xpose.msra.mxu0 0
  %1043 = vmatprep.mubr.bf16.mxu0 0
  %1044 = vmatmul.mubr.bf16.gmra.mrb[0].mxu0 %v1001
  %v1045 = vpop.f32.mrb[0].mxu0
  %v1046 = vadd.f32 %v1010, %v1045
  %v1047 = vpop.f32.mrb[0].mxu0
  %v1048 = vpop.f32.mrb[0].mxu0
  %v1049 = vpop.f32.mrb[0].mxu0
  %1050 = vdwg.mxu0
  %v1051 = vstv %s158
  %v1052 = vmul.f32 %v1051, %v1046
  %1053 = vst [vmem:[%s7] sm:$0x3f] %v1052
  %s1054 = scalar_lea.vmem %s1, 128
  %v1055 = vld [vmem:[%s1054] sm:$0xff]
  %v1056 = vld [vmem:[%s1054 + $0x8] sm:$0xff]
  %v1057 = vld [vmem:[%s1054 + $0x10] sm:$0xff]
  %v1058 = vld [vmem:[%s1054 + $0x18] sm:$0xff]
  %v1059 = vld [vmem:[%s1054 + $0x20] sm:$0xff]
  %v1060 = vld [vmem:[%s1054 + $0x28] sm:$0xff]
  %v1061 = vld [vmem:[%s1054 + $0x30] sm:$0xff]
  %v1062 = vld [vmem:[%s1054 + $0x38] sm:$0xff]
  %v1063 = vld [vmem:[%s1054 + $0x40] sm:$0x3]
  %v1064 = vld [vmem:[%s1054 + $0x48] sm:$0x3]
  %v1065 = vld [vmem:[%s1054 + $0x50] sm:$0x3]
  %v1066 = vld [vmem:[%s1054 + $0x58] sm:$0x3]
  %v1067 = vld [vmem:[%s1054 + $0x60] sm:$0x3]
  %v1068 = vld [vmem:[%s1054 + $0x68] sm:$0x3]
  %v1069 = vld [vmem:[%s1054 + $0x70] sm:$0x3]
  %v1070 = vld [vmem:[%s1054 + $0x78] sm:$0x3]
  %v1071 = vpack.c.bf16 %v1063, %v1055
  %v1072 = vpack.c.bf16 %v1064, %v1056
  %v1073 = vpack.c.bf16 %v1065, %v1057
  %v1074 = vpack.c.bf16 %v1066, %v1058
  %v1075 = vpack.c.bf16 %v1067, %v1059
  %v1076 = vpack.c.bf16 %v1068, %v1060
  %v1077 = vpack.c.bf16 %v1069, %v1061
  %v1078 = vpack.c.bf16 %v1070, %v1062
  %s1079 = scalar_lea.vmem %s2, 64
  %v1080 = vld [vmem:[%s1079] sm:$0x3f]
  %v1081 = vld [vmem:[%s1079 + $0x8] sm:$0x3f]
  %v1082 = vld [vmem:[%s1079 + $0x10] sm:$0x3f]
  %v1083 = vld [vmem:[%s1079 + $0x18] sm:$0x3f]
  %v1084 = vld [vmem:[%s1079 + $0x20] sm:$0x3f]
  %v1085 = vld [vmem:[%s1079 + $0x28] sm:$0x3f]
  %v1086 = vld [vmem:[%s1079 + $0x30] sm:$0x3f]
  %v1087 = vld [vmem:[%s1079 + $0x38] sm:$0x3f]
  %v1088 = vpack.c.bf16 %v1080, %v1080
  %v1089 = vpack.c.bf16 %v1081, %v1081
  %v1090 = vpack.c.bf16 %v1082, %v1082
  %v1091 = vpack.c.bf16 %v1083, %v1083
  %v1092 = vpack.c.bf16 %v1084, %v1084
  %v1093 = vpack.c.bf16 %v1085, %v1085
  %v1094 = vpack.c.bf16 %v1086, %v1086
  %v1095 = vpack.c.bf16 %v1087, %v1087
  %1096 = vmatprep.subr.bf16.mxu0 0
  %1097 = vmatpush1.bf16.msra.mxu0 %v470
  %1098 = vmatprep.subr.bf16.mxu0 0
  %1099 = vmatpush1.bf16.msra.mxu0 %v471
  %1100 = vmatprep.subr.bf16.mxu0 0
  %1101 = vmatpush1.bf16.msra.mxu0 %v472
  %1102 = vmatprep.subr.bf16.mxu0 0
  %1103 = vmatpush1.bf16.msra.mxu0 %v473
  %1104 = vmatprep.subr.bf16.mxu0 0
  %1105 = vmatpush1.bf16.msra.mxu0 %v474
  %1106 = vmatprep.subr.bf16.mxu0 0
  %1107 = vmatpush1.bf16.msra.mxu0 %v475
  %1108 = vmatprep.subr.bf16.mxu0 0
  %1109 = vmatpush1.bf16.msra.mxu0 %v476
  %1110 = vmatprep.subr.bf16.mxu0 0
  %1111 = vmatpush1.bf16.msra.mxu0 %v477
  %1112 = vmatprep.subr.bf16.mxu0 0
  %1113 = vmatpush1.bf16.msra.mxu0 %v478
  %1114 = vmatprep.subr.bf16.mxu0 0
  %1115 = vmatpush1.bf16.msra.mxu0 %v479
  %1116 = vmatprep.subr.bf16.mxu0 0
  %1117 = vmatpush1.bf16.msra.mxu0 %v480
  %1118 = vmatprep.subr.bf16.mxu0 0
  %1119 = vmatpush1.bf16.msra.mxu0 %v481
  %1120 = vmatprep.subr.bf16.mxu0 0
  %1121 = vmatpush1.bf16.msra.mxu0 %v482
  %1122 = vmatprep.subr.bf16.mxu0 0
  %1123 = vmatpush1.bf16.msra.mxu0 %v483
  %1124 = vmatprep.subr.bf16.mxu0 0
  %1125 = vmatpush1.bf16.msra.mxu0 %v484
  %1126 = vmatprep.subr.bf16.mxu0 0
  %1127 = vmatpush1.bf16.msra.mxu0 %v485
  %1128 = vmatprep.mubr.bf16.mxu0 %v1072
  %1129 = vmatmul.mubr.bf16.gmra.mrb[0].mxu0 %v1071
  %v1130 = vpop.f32.mrb[0].mxu0
  %v1131 = vadd.f32 %v212, %v1130
  %v1132 = vpop.f32.mrb[0].mxu0
  %v1133 = vpop.f32.mrb[0].mxu0
  %v1134 = vadd.f32 %v212, %v1133
  %v1135 = vpop.f32.mrb[0].mxu0
  %1136 = vdwg.mxu0
  %1137 = vmatprep.subr.bf16.mxu0 0
  %1138 = vmatpush1.bf16.msra.mxu0 %v486
  %1139 = vmatprep.subr.bf16.mxu0 0
  %1140 = vmatpush1.bf16.msra.mxu0 %v487
  %1141 = vmatprep.subr.bf16.mxu0 0
  %1142 = vmatpush1.bf16.msra.mxu0 %v488
  %1143 = vmatprep.subr.bf16.mxu0 0
  %1144 = vmatpush1.bf16.msra.mxu0 %v489
  %1145 = vmatprep.subr.bf16.mxu0 0
  %1146 = vmatpush1.bf16.msra.mxu0 %v490
  %1147 = vmatprep.subr.bf16.mxu0 0
  %1148 = vmatpush1.bf16.msra.mxu0 %v491
  %1149 = vmatprep.subr.bf16.mxu0 0
  %1150 = vmatpush1.bf16.msra.mxu0 %v492
  %1151 = vmatprep.subr.bf16.mxu0 0
  %1152 = vmatpush1.bf16.msra.mxu0 %v493
  %1153 = vmatprep.subr.bf16.mxu0 0
  %1154 = vmatpush1.bf16.msra.mxu0 %v494
  %1155 = vmatprep.subr.bf16.mxu0 0
  %1156 = vmatpush1.bf16.msra.mxu0 %v495
  %1157 = vmatprep.subr.bf16.mxu0 0
  %1158 = vmatpush1.bf16.msra.mxu0 %v496
  %1159 = vmatprep.subr.bf16.mxu0 0
  %1160 = vmatpush1.bf16.msra.mxu0 %v497
  %1161 = vmatprep.subr.bf16.mxu0 0
  %1162 = vmatpush1.bf16.msra.mxu0 %v498
  %1163 = vmatprep.subr.bf16.mxu0 0
  %1164 = vmatpush1.bf16.msra.mxu0 %v499
  %1165 = vmatprep.subr.bf16.mxu0 0
  %1166 = vmatpush1.bf16.msra.mxu0 %v500
  %1167 = vmatprep.subr.bf16.mxu0 0
  %1168 = vmatpush1.bf16.msra.mxu0 %v501
  %1169 = vmatprep.mubr.bf16.mxu0 %v1074
  %1170 = vmatmul.mubr.bf16.gmra.mrb[0].mxu0 %v1073
  %v1171 = vpop.f32.mrb[0].mxu0
  %v1172 = vadd.f32 %v1131, %v1171
  %v1173 = vpop.f32.mrb[0].mxu0
  %v1174 = vpop.f32.mrb[0].mxu0
  %v1175 = vadd.f32 %v1134, %v1174
  %v1176 = vpop.f32.mrb[0].mxu0
  %1177 = vdwg.mxu0
  %1178 = vmatprep.subr.bf16.mxu0 0
  %1179 = vmatpush1.bf16.msra.mxu0 %v502
  %1180 = vmatprep.subr.bf16.mxu0 0
  %1181 = vmatpush1.bf16.msra.mxu0 %v503
  %1182 = vmatprep.subr.bf16.mxu0 0
  %1183 = vmatpush1.bf16.msra.mxu0 %v504
  %1184 = vmatprep.subr.bf16.mxu0 0
  %1185 = vmatpush1.bf16.msra.mxu0 %v505
  %1186 = vmatprep.subr.bf16.mxu0 0
  %1187 = vmatpush1.bf16.msra.mxu0 %v506
  %1188 = vmatprep.subr.bf16.mxu0 0
  %1189 = vmatpush1.bf16.msra.mxu0 %v507
  %1190 = vmatprep.subr.bf16.mxu0 0
  %1191 = vmatpush1.bf16.msra.mxu0 %v508
  %1192 = vmatprep.subr.bf16.mxu0 0
  %1193 = vmatpush1.bf16.msra.mxu0 %v509
  %1194 = vmatprep.subr.bf16.mxu0 0
  %1195 = vmatpush1.bf16.msra.mxu0 %v510
  %1196 = vmatprep.subr.bf16.mxu0 0
  %1197 = vmatpush1.bf16.msra.mxu0 %v511
  %1198 = vmatprep.subr.bf16.mxu0 0
  %1199 = vmatpush1.bf16.msra.mxu0 %v512
  %1200 = vmatprep.subr.bf16.mxu0 0
  %1201 = vmatpush1.bf16.msra.mxu0 %v513
  %1202 = vmatprep.subr.bf16.mxu0 0
  %1203 = vmatpush1.bf16.msra.mxu0 %v514
  %1204 = vmatprep.subr.bf16.mxu0 0
  %1205 = vmatpush1.bf16.msra.mxu0 %v515
  %1206 = vmatprep.subr.bf16.mxu0 0
  %1207 = vmatpush1.bf16.msra.mxu0 %v516
  %1208 = vmatprep.subr.bf16.mxu0 0
  %1209 = vmatpush1.bf16.msra.mxu0 %v517
  %1210 = vmatprep.mubr.bf16.mxu0 %v1076
  %1211 = vmatmul.mubr.bf16.gmra.mrb[0].mxu0 %v1075
  %v1212 = vpop.f32.mrb[0].mxu0
  %v1213 = vadd.f32 %v1172, %v1212
  %v1214 = vpop.f32.mrb[0].mxu0
  %v1215 = vpop.f32.mrb[0].mxu0
  %v1216 = vadd.f32 %v1175, %v1215
  %v1217 = vpop.f32.mrb[0].mxu0
  %1218 = vdwg.mxu0
  %1219 = vmatprep.subr.bf16.mxu0 0
  %1220 = vmatpush1.bf16.msra.mxu0 %v518
  %1221 = vmatprep.subr.bf16.mxu0 0
  %1222 = vmatpush1.bf16.msra.mxu0 %v519
  %1223 = vmatprep.subr.bf16.mxu0 0
  %1224 = vmatpush1.bf16.msra.mxu0 %v520
  %1225 = vmatprep.subr.bf16.mxu0 0
  %1226 = vmatpush1.bf16.msra.mxu0 %v521
  %1227 = vmatprep.subr.bf16.mxu0 0
  %1228 = vmatpush1.bf16.msra.mxu0 %v522
  %1229 = vmatprep.subr.bf16.mxu0 0
  %1230 = vmatpush1.bf16.msra.mxu0 %v523
  %1231 = vmatprep.subr.bf16.mxu0 0
  %1232 = vmatpush1.bf16.msra.mxu0 %v524
  %1233 = vmatprep.subr.bf16.mxu0 0
  %1234 = vmatpush1.bf16.msra.mxu0 %v525
  %1235 = vmatprep.subr.bf16.mxu0 0
  %1236 = vmatpush1.bf16.msra.mxu0 %v526
  %1237 = vmatprep.subr.bf16.mxu0 0
  %1238 = vmatpush1.bf16.msra.mxu0 %v527
  %1239 = vmatprep.subr.bf16.mxu0 0
  %1240 = vmatpush1.bf16.msra.mxu0 %v528
  %1241 = vmatprep.subr.bf16.mxu0 0
  %1242 = vmatpush1.bf16.msra.mxu0 %v529
  %1243 = vmatprep.subr.bf16.mxu0 0
  %1244 = vmatpush1.bf16.msra.mxu0 %v530
  %1245 = vmatprep.subr.bf16.mxu0 0
  %1246 = vmatpush1.bf16.msra.mxu0 %v531
  %1247 = vmatprep.subr.bf16.mxu0 0
  %1248 = vmatpush1.bf16.msra.mxu0 %v532
  %1249 = vmatprep.subr.bf16.mxu0 0
  %1250 = vmatpush1.bf16.msra.mxu0 %v533
  %1251 = vmatprep.mubr.bf16.mxu0 %v1078
  %1252 = vmatmul.mubr.bf16.gmra.mrb[0].mxu0 %v1077
  %v1253 = vpop.f32.mrb[0].mxu0
  %v1254 = vadd.f32 %v1213, %v1253
  %v1255 = vpop.f32.mrb[0].mxu0
  %v1256 = vpop.f32.mrb[0].mxu0
  %v1257 = vadd.f32 %v1216, %v1256
  %v1258 = vpop.f32.mrb[0].mxu0
  %1259 = vdwg.mxu0
  %v1260 = vmax.f32 %v1254, 0.0
  %v1261 = vmax.f32 %v1257, 0.0
  %1262 = vmatprep.subr.bf16.mxu0 0
  %1263 = vmatpush1.bf16.msra.mxu0 %v470
  %1264 = vmatprep.subr.bf16.mxu0 0
  %1265 = vmatpush1.bf16.msra.mxu0 %v471
  %1266 = vmatprep.subr.bf16.mxu0 0
  %1267 = vmatpush1.bf16.msra.mxu0 %v472
  %1268 = vmatprep.subr.bf16.mxu0 0
  %1269 = vmatpush1.bf16.msra.mxu0 %v473
  %1270 = vmatprep.subr.bf16.mxu0 0
  %1271 = vmatpush1.bf16.msra.mxu0 %v474
  %1272 = vmatprep.subr.bf16.mxu0 0
  %1273 = vmatpush1.bf16.msra.mxu0 %v475
  %1274 = vmatprep.subr.bf16.mxu0 0
  %1275 = vmatpush1.bf16.msra.mxu0 %v476
  %1276 = vmatprep.subr.bf16.mxu0 0
  %1277 = vmatpush1.bf16.msra.mxu0 %v477
  %1278 = vmatprep.subr.bf16.mxu0 0
  %1279 = vmatpush1.bf16.msra.mxu0 %v478
  %1280 = vmatprep.subr.bf16.mxu0 0
  %1281 = vmatpush1.bf16.msra.mxu0 %v479
  %1282 = vmatprep.subr.bf16.mxu0 0
  %1283 = vmatpush1.bf16.msra.mxu0 %v480
  %1284 = vmatprep.subr.bf16.mxu0 0
  %1285 = vmatpush1.bf16.msra.mxu0 %v481
  %1286 = vmatprep.subr.bf16.mxu0 0
  %1287 = vmatpush1.bf16.msra.mxu0 %v482
  %1288 = vmatprep.subr.bf16.mxu0 0
  %1289 = vmatpush1.bf16.msra.mxu0 %v483
  %1290 = vmatprep.subr.bf16.mxu0 0
  %1291 = vmatpush1.bf16.msra.mxu0 %v484
  %1292 = vmatprep.subr.bf16.mxu0 0
  %1293 = vmatpush1.bf16.msra.mxu0 %v485
  %1294 = vmatprep.mubr.bf16.mxu0 %v1089
  %1295 = vmatmul.mubr.bf16.gmra.mrb[0].mxu0 %v1088
  %v1296 = vpop.f32.mrb[0].mxu0
  %v1297 = vadd.f32 %v212, %v1296
  %v1298 = vpop.f32.mrb[0].mxu0
  %v1299 = vpop.f32.mrb[0].mxu0
  %v1300 = vpop.f32.mrb[0].mxu0
  %1301 = vdwg.mxu0
  %1302 = vmatprep.subr.bf16.mxu0 0
  %1303 = vmatpush1.bf16.msra.mxu0 %v486
  %1304 = vmatprep.subr.bf16.mxu0 0
  %1305 = vmatpush1.bf16.msra.mxu0 %v487
  %1306 = vmatprep.subr.bf16.mxu0 0
  %1307 = vmatpush1.bf16.msra.mxu0 %v488
  %1308 = vmatprep.subr.bf16.mxu0 0
  %1309 = vmatpush1.bf16.msra.mxu0 %v489
  %1310 = vmatprep.subr.bf16.mxu0 0
  %1311 = vmatpush1.bf16.msra.mxu0 %v490
  %1312 = vmatprep.subr.bf16.mxu0 0
  %1313 = vmatpush1.bf16.msra.mxu0 %v491
  %1314 = vmatprep.subr.bf16.mxu0 0
  %1315 = vmatpush1.bf16.msra.mxu0 %v492
  %1316 = vmatprep.subr.bf16.mxu0 0
  %1317 = vmatpush1.bf16.msra.mxu0 %v493
  %1318 = vmatprep.subr.bf16.mxu0 0
  %1319 = vmatpush1.bf16.msra.mxu0 %v494
  %1320 = vmatprep.subr.bf16.mxu0 0
  %1321 = vmatpush1.bf16.msra.mxu0 %v495
  %1322 = vmatprep.subr.bf16.mxu0 0
  %1323 = vmatpush1.bf16.msra.mxu0 %v496
  %1324 = vmatprep.subr.bf16.mxu0 0
  %1325 = vmatpush1.bf16.msra.mxu0 %v497
  %1326 = vmatprep.subr.bf16.mxu0 0
  %1327 = vmatpush1.bf16.msra.mxu0 %v498
  %1328 = vmatprep.subr.bf16.mxu0 0
  %1329 = vmatpush1.bf16.msra.mxu0 %v499
  %1330 = vmatprep.subr.bf16.mxu0 0
  %1331 = vmatpush1.bf16.msra.mxu0 %v500
  %1332 = vmatprep.subr.bf16.mxu0 0
  %1333 = vmatpush1.bf16.msra.mxu0 %v501
  %1334 = vmatprep.mubr.bf16.mxu0 %v1091
  %1335 = vmatmul.mubr.bf16.gmra.mrb[0].mxu0 %v1090
  %v1336 = vpop.f32.mrb[0].mxu0
  %v1337 = vadd.f32 %v1297, %v1336
  %v1338 = vpop.f32.mrb[0].mxu0
  %v1339 = vpop.f32.mrb[0].mxu0
  %v1340 = vpop.f32.mrb[0].mxu0
  %1341 = vdwg.mxu0
  %1342 = vmatprep.subr.bf16.mxu0 0
  %1343 = vmatpush1.bf16.msra.mxu0 %v502
  %1344 = vmatprep.subr.bf16.mxu0 0
  %1345 = vmatpush1.bf16.msra.mxu0 %v503
  %1346 = vmatprep.subr.bf16.mxu0 0
  %1347 = vmatpush1.bf16.msra.mxu0 %v504
  %1348 = vmatprep.subr.bf16.mxu0 0
  %1349 = vmatpush1.bf16.msra.mxu0 %v505
  %1350 = vmatprep.subr.bf16.mxu0 0
  %1351 = vmatpush1.bf16.msra.mxu0 %v506
  %1352 = vmatprep.subr.bf16.mxu0 0
  %1353 = vmatpush1.bf16.msra.mxu0 %v507
  %1354 = vmatprep.subr.bf16.mxu0 0
  %1355 = vmatpush1.bf16.msra.mxu0 %v508
  %1356 = vmatprep.subr.bf16.mxu0 0
  %1357 = vmatpush1.bf16.msra.mxu0 %v509
  %1358 = vmatprep.subr.bf16.mxu0 0
  %1359 = vmatpush1.bf16.msra.mxu0 %v510
  %1360 = vmatprep.subr.bf16.mxu0 0
  %1361 = vmatpush1.bf16.msra.mxu0 %v511
  %1362 = vmatprep.subr.bf16.mxu0 0
  %1363 = vmatpush1.bf16.msra.mxu0 %v512
  %1364 = vmatprep.subr.bf16.mxu0 0
  %1365 = vmatpush1.bf16.msra.mxu0 %v513
  %1366 = vmatprep.subr.bf16.mxu0 0
  %1367 = vmatpush1.bf16.msra.mxu0 %v514
  %1368 = vmatprep.subr.bf16.mxu0 0
  %1369 = vmatpush1.bf16.msra.mxu0 %v515
  %1370 = vmatprep.subr.bf16.mxu0 0
  %1371 = vmatpush1.bf16.msra.mxu0 %v516
  %1372 = vmatprep.subr.bf16.mxu0 0
  %1373 = vmatpush1.bf16.msra.mxu0 %v517
  %1374 = vmatprep.mubr.bf16.mxu0 %v1093
  %1375 = vmatmul.mubr.bf16.gmra.mrb[0].mxu0 %v1092
  %v1376 = vpop.f32.mrb[0].mxu0
  %v1377 = vadd.f32 %v1337, %v1376
  %v1378 = vpop.f32.mrb[0].mxu0
  %v1379 = vpop.f32.mrb[0].mxu0
  %v1380 = vpop.f32.mrb[0].mxu0
  %1381 = vdwg.mxu0
  %1382 = vmatprep.subr.bf16.mxu0 0
  %1383 = vmatpush1.bf16.msra.mxu0 %v518
  %1384 = vmatprep.subr.bf16.mxu0 0
  %1385 = vmatpush1.bf16.msra.mxu0 %v519
  %1386 = vmatprep.subr.bf16.mxu0 0
  %1387 = vmatpush1.bf16.msra.mxu0 %v520
  %1388 = vmatprep.subr.bf16.mxu0 0
  %1389 = vmatpush1.bf16.msra.mxu0 %v521
  %1390 = vmatprep.subr.bf16.mxu0 0
  %1391 = vmatpush1.bf16.msra.mxu0 %v522
  %1392 = vmatprep.subr.bf16.mxu0 0
  %1393 = vmatpush1.bf16.msra.mxu0 %v523
  %1394 = vmatprep.subr.bf16.mxu0 0
  %1395 = vmatpush1.bf16.msra.mxu0 %v524
  %1396 = vmatprep.subr.bf16.mxu0 0
  %1397 = vmatpush1.bf16.msra.mxu0 %v525
  %1398 = vmatprep.subr.bf16.mxu0 0
  %1399 = vmatpush1.bf16.msra.mxu0 %v526
  %1400 = vmatprep.subr.bf16.mxu0 0
  %1401 = vmatpush1.bf16.msra.mxu0 %v527
  %1402 = vmatprep.subr.bf16.mxu0 0
  %1403 = vmatpush1.bf16.msra.mxu0 %v528
  %1404 = vmatprep.subr.bf16.mxu0 0
  %1405 = vmatpush1.bf16.msra.mxu0 %v529
  %1406 = vmatprep.subr.bf16.mxu0 0
  %1407 = vmatpush1.bf16.msra.mxu0 %v530
  %1408 = vmatprep.subr.bf16.mxu0 0
  %1409 = vmatpush1.bf16.msra.mxu0 %v531
  %1410 = vmatprep.subr.bf16.mxu0 0
  %1411 = vmatpush1.bf16.msra.mxu0 %v532
  %1412 = vmatprep.subr.bf16.mxu0 0
  %1413 = vmatpush1.bf16.msra.mxu0 %v533
  %1414 = vmatprep.mubr.bf16.mxu0 %v1095
  %1415 = vmatmul.mubr.bf16.gmra.mrb[0].mxu0 %v1094
  %v1416 = vpop.f32.mrb[0].mxu0
  %v1417 = vadd.f32 %v1377, %v1416
  %v1418 = vpop.f32.mrb[0].mxu0
  %v1419 = vpop.f32.mrb[0].mxu0
  %v1420 = vpop.f32.mrb[0].mxu0
  %1421 = vdwg.mxu0
  %v1422 = vmax.f32 %v1417, 0.0
  %s1423 = scalar_lea.vmem %s0, 1
  %v1424 = vld [vmem:[%s1423] sm:$0x1]
  %v1425 = vlaneseq
  %v1426 = vshrl.u32 %v1425, 7
  %v1427 = vsub.s32 0, %v1426
  %v1428 = vrot.slane %v1424, %v1427
  %vm1429 = vcmp.eq.s32.totalorder %v927, %v1428
  %v1430 = vsel %vm1429, 1, 0
  %v1431 = vcvt.s32.f32 %v1430
  %v1432 = vpack.c.bf16 %v1431, %v1431
  %v1433 = vpack.c.bf16 %v1261, %v1260
  %v1435 = vsel %vm937, %v1432, 0
  %v1438 = vsel %vm941, %v1433, 0
  %1440 = vmatprep.subr.bf16.mxu0 0
  %1441 = vmatpush1.bf16.msra.mxu0 %v1438
  %1442 = vmatprep.subr.bf16.mxu0 0
  %1443 = vmatpush1.bf16.msra.mxu0 0
  %1444 = vmatprep.subr.bf16.mxu0 0
  %1445 = vmatpush1.bf16.msra.mxu0 0
  %1446 = vmatprep.subr.bf16.mxu0 0
  %1447 = vmatpush1.bf16.msra.mxu0 0
  %1448 = vmatprep.subr.bf16.mxu0 0
  %1449 = vmatpush1.bf16.msra.mxu0 0
  %1450 = vmatprep.subr.bf16.mxu0 0
  %1451 = vmatpush1.bf16.msra.mxu0 0
  %1452 = vmatprep.subr.bf16.mxu0 0
  %1453 = vmatpush1.bf16.msra.mxu0 0
  %1454 = vmatprep.subr.bf16.mxu0 0
  %1455 = vmatpush1.bf16.msra.mxu0 0
  %1456 = vmatprep.subr.bf16.mxu0 0
  %1457 = vmatpush1.bf16.msra.mxu0 0
  %1458 = vmatprep.subr.bf16.mxu0 0
  %1459 = vmatpush1.bf16.msra.mxu0 0
  %1460 = vmatprep.subr.bf16.mxu0 0
  %1461 = vmatpush1.bf16.msra.mxu0 0
  %1462 = vmatprep.subr.bf16.mxu0 0
  %1463 = vmatpush1.bf16.msra.mxu0 0
  %1464 = vmatprep.subr.bf16.mxu0 0
  %1465 = vmatpush1.bf16.msra.mxu0 0
  %1466 = vmatprep.subr.bf16.mxu0 0
  %1467 = vmatpush1.bf16.msra.mxu0 0
  %1468 = vmatprep.subr.bf16.mxu0 0
  %1469 = vmatpush1.bf16.msra.mxu0 0
  %1470 = vmatprep.subr.bf16.mxu0 0
  %1471 = vmatpush1.bf16.msra.mxu0 0
  %1472 = vmatprep.mubr.bf16.mxu0 0
  %1473 = vmatmul.mubr.bf16.gmra.mrb[0].mxu0 %v1435
  %v1474 = vpop.f32.mrb[0].mxu0
  %v1475 = vadd.f32 0.0, %v1474
  %v1476 = vpop.f32.mrb[0].mxu0
  %v1477 = vpop.f32.mrb[0].mxu0
  %v1478 = vpop.f32.mrb[0].mxu0
  %1479 = vdwg.mxu0
  %v1480 = vmul.f32 %v1475, %v1475
  %1481 = vadd.xlane.f32.xlu0 %v1480
  %v1482 = vpop.xlane.xlu0 %1481
  %v1483 = vmax.f32 %v1482, 1e-24
  %v1484 = vrsqrt.pop %v1483
  %v1485 = vmul.f32 %v1475, %v1484
  %v1486 = vmul.f32 %v1422, %v1422
  %v1487 = vsel %vm992, %v1486, 0.0
  %1488 = vadd.xlane.f32.xlu0 %v1487
  %v1489 = vpop.xlane.xlu0 %1488
  %v1490 = vmax.f32 %v1489, 1e-24
  %v1491 = vrsqrt.pop %v1490
  %v1492 = vmul.f32 %v1422, %v1491
  %v1493 = vpack.c.bf16 %v1485, %v1485
  %1494 = vst [vmem:[#allocation2] sm:$0xf] %v1493
  %v1495 = vpack.c.bf16 %v1492, %v1492
  %v1496 = vld [vmem:[#allocation2] sm:$0xff]
  %v1497 = vld [vmem:[#allocation2 + $0x8] sm:$0xff]
  %v1498 = vld [vmem:[#allocation2 + $0x10] sm:$0xff]
  %v1499 = vld [vmem:[#allocation2 + $0x18] sm:$0xff]
  %v1500 = vld [vmem:[#allocation2 + $0x20] sm:$0xff]
  %v1501 = vld [vmem:[#allocation2 + $0x28] sm:$0xff]
  %v1502 = vld [vmem:[#allocation2 + $0x30] sm:$0xff]
  %v1503 = vld [vmem:[#allocation2 + $0x38] sm:$0xff]
  %1504 = vmatprep.subr.bf16.mxu0 0
  %1505 = vmatpush1.bf16.xpose.msra.mxu0 %v1496
  %1506 = vmatprep.subr.bf16.mxu0 0
  %1507 = vmatpush1.bf16.xpose.msra.mxu0 %v1497
  %1508 = vmatprep.subr.bf16.mxu0 0
  %1509 = vmatpush1.bf16.xpose.msra.mxu0 %v1498
  %1510 = vmatprep.subr.bf16.mxu0 0
  %1511 = vmatpush1.bf16.xpose.msra.mxu0 %v1499
  %1512 = vmatprep.subr.bf16.mxu0 0
  %1513 = vmatpush1.bf16.xpose.msra.mxu0 %v1500
  %1514 = vmatprep.subr.bf16.mxu0 0
  %1515 = vmatpush1.bf16.xpose.msra.mxu0 %v1501
  %1516 = vmatprep.subr.bf16.mxu0 0
  %1517 = vmatpush1.bf16.xpose.msra.mxu0 %v1502
  %1518 = vmatprep.subr.bf16.mxu0 0
  %1519 = vmatpush1.bf16.xpose.msra.mxu0 %v1503
  %1520 = vmatprep.subr.bf16.mxu0 0
  %1521 = vmatpush1.bf16.xpose.msra.mxu0 0
  %1522 = vmatprep.subr.bf16.mxu0 0
  %1523 = vmatpush1.bf16.xpose.msra.mxu0 0
  %1524 = vmatprep.subr.bf16.mxu0 0
  %1525 = vmatpush1.bf16.xpose.msra.mxu0 0
  %1526 = vmatprep.subr.bf16.mxu0 0
  %1527 = vmatpush1.bf16.xpose.msra.mxu0 0
  %1528 = vmatprep.subr.bf16.mxu0 0
  %1529 = vmatpush1.bf16.xpose.msra.mxu0 0
  %1530 = vmatprep.subr.bf16.mxu0 0
  %1531 = vmatpush1.bf16.xpose.msra.mxu0 0
  %1532 = vmatprep.subr.bf16.mxu0 0
  %1533 = vmatpush1.bf16.xpose.msra.mxu0 0
  %1534 = vmatprep.subr.bf16.mxu0 0
  %1535 = vmatpush1.bf16.xpose.msra.mxu0 0
  %1536 = vmatprep.mubr.bf16.mxu0 0
  %1537 = vmatmul.mubr.bf16.gmra.mrb[0].mxu0 %v1495
  %v1538 = vpop.f32.mrb[0].mxu0
  %v1539 = vadd.f32 %v1010, %v1538
  %v1540 = vpop.f32.mrb[0].mxu0
  %v1541 = vpop.f32.mrb[0].mxu0
  %v1542 = vpop.f32.mrb[0].mxu0
  %1543 = vdwg.mxu0
  %v1544 = vmul.f32 %v1051, %v1539
  %s1545 = scalar_lea.vmem %s7, 8
  %1546 = vst [vmem:[%s1545] sm:$0x3f] %v1544
  // Predicated region
  $region30: #{protonet_forward.1} parent=0 // pred_check
    _
  $region31: #{protonet_forward.1} parent=0 // pred_check_branch
    %1548 = sbr.rel (0) target = $region33
  $region32: #{protonet_forward.1} parent=0 // pred_region
    _
  $region33: #{protonet_forward.1} parent=0 // pred_fallthru
    _
  // Predicated region
  $region34: #{protonet_forward.1} parent=0 // pred_check
    _
  $region35: #{protonet_forward.1} parent=0 // pred_check_branch
    %1550 = sbr.rel (0) target = $region37
  $region36: #{protonet_forward.1} parent=0 // pred_region
    _
  $region37: #{protonet_forward.1} parent=0 // pred_fallthru
    _

</llo_original>
